<compile_context>
chip_gen: v5e
topology: v5e:2x2
jax: 0.10.0
libtpu: 0.0.40
codegen_flags: <defaults>
</compile_context>

<pallas_src>
import math
import functools

import jax
import jax.numpy as jnp
from jax import lax
from jax.experimental import pallas as pl
from jax.experimental.pallas import tpu as pltpu


# Stacked (per-layer) weight order as fed to the kernel.
_BLOCK_WEIGHT_ORDER = ("ln1w", "ln1b", "ln2w", "ln2b",
                       "wqkv", "bqkv", "wp", "bp",
                       "w1", "b1", "w2", "b2")


# ----------------------------------------------------------------------------- #
# Pallas kernel (all layers + heads fused)
# ----------------------------------------------------------------------------- #
def _layernorm(x, w_row, b_row, eps=1e-5):
    # x: (..., F); w_row/b_row: (1, F)
    mu = jnp.mean(x, axis=-1, keepdims=True)
    var = jnp.mean(jnp.square(x - mu), axis=-1, keepdims=True)
    return (x - mu) * lax.rsqrt(var + eps) * w_row + b_row


def fused_bert_kernel(x0_ref, mask_ref,
                      ln1w_ref, ln1b_ref, ln2w_ref, ln2b_ref,
                      wqkv_ref, bqkv_ref, wp_ref, bp_ref,
                      w1_ref, b1_ref, w2_ref, b2_ref,
                      tgt_ref, wimp_ref, bimp_ref, we1_ref, be1_ref,
                      wex_ref, bex_ref,
                      click_ref, action_ref,
                      x_acc,
                      *, n_head, batch, seq):
    """One grid step == one transformer layer applied to the WHOLE batch.

    x0_ref   : (B*T, F) initial activations (read once, at layer 0)
    mask_ref : (B, 1, T) int32 key mask (0 == masked out), same for every query row
    *_ref weights: per-layer slice (1, ...) of the layer-stacked parameter
    x_acc    : (B*T, F) f32 VMEM scratch holding activations across layers
    click_ref/action_ref: (B, 1) outputs, written on the last layer only
    """
    layer = pl.program_id(0)

    @pl.when(layer == 0)
    def _():
        x_acc[...] = x0_ref[...]

    x = x_acc[...]                            # (B*T, F)
    BT, F = x.shape
    hs = F // n_head

    # ---- attention sub-layer: x = x + Wp(MHA(LN1(x))) + bp ----
    h = _layernorm(x, ln1w_ref[0], ln1b_ref[0])
    # Fused QKV projection: single (BT,F)x(F,3F) MXU pass.
    # 1/sqrt(hs) is folded into the Q columns of wqkv/bqkv at parameter-prep time.
    qkv = jnp.dot(h, wqkv_ref[0], preferred_element_type=jnp.float32) + bqkv_ref[0]
    qkv3 = qkv.reshape(batch, seq, 3 * F)     # lanes: [Q | K | V]

    key_masked = (mask_ref[...] == 0)         # (B, 1, T) -> broadcast over query rows
    wp = wp_ref[0]                            # (F, F)
    neg = jnp.float32(-1e30)                  # stand-in for -inf (exp underflows to 0)

    y = jnp.zeros((BT, F), jnp.float32)
    for hd in range(n_head):
        o = hd * hs
        q_h = qkv3[:, :, o:o + hs]                        # (B, T, hs)
        k_h = qkv3[:, :, F + o:F + o + hs]                # (B, T, hs)
        v_h = qkv3[:, :, 2 * F + o:2 * F + o + hs]        # (B, T, hs)
        att = jnp.einsum('bqd,bkd->bqk', q_h, k_h,
                         preferred_element_type=jnp.float32)          # (B, T, T)
        att = jnp.where(key_masked, neg, att)
        att = att - jnp.max(att, axis=-1, keepdims=True)
        p = jnp.exp(att)
        p = p * pl.reciprocal(jnp.sum(p, axis=-1, keepdims=True), approx=True)
        yh = jnp.einsum('bqk,bkd->bqd', p, v_h,
                        preferred_element_type=jnp.float32)           # (B, T, hs)
        # concat(heads) @ Wp == sum_h head_h @ Wp[h*hs:(h+1)*hs, :]  (sublane slice)
        y = y + jnp.dot(yh.reshape(BT, hs), wp[o:o + hs, :],
                        preferred_element_type=jnp.float32)
    x = x + y + bp_ref[0]                     # dropouts are eval no-ops

    # ---- MLP sub-layer: x = x + W2(GELU(W1(LN2(x)))) ----
    h2 = _layernorm(x, ln2w_ref[0], ln2b_ref[0])
    m = jnp.dot(h2, w1_ref[0], preferred_element_type=jnp.float32) + b1_ref[0]
    # exact (erf-based) GELU == PyTorch nn.GELU() default
    m = 0.5 * m * (1.0 + lax.erf(m * jnp.float32(1.0 / math.sqrt(2.0))))
    m = jnp.dot(m, w2_ref[0], preferred_element_type=jnp.float32) + b2_ref[0]
    x = x + m

    x_acc[...] = x

    # ---- prediction heads, fused into the last layer step ----
    @pl.when(layer == pl.num_programs(0) - 1)
    def _():
        user_rep = x.reshape(batch, seq, F)[:, 0, :]                  # (B, F)  (token 0)
        ut = user_rep * tgt_ref[...]                                   # (B, F)
        # N=1 output columns -> VPU mul + lane reduction instead of MXU matmul
        click_ref[...] = jax.nn.sigmoid(
            jnp.sum(ut * wimp_ref[...], axis=-1, keepdims=True) + bimp_ref[...])
        hidden = jax.nn.sigmoid(
            jnp.dot(ut, we1_ref[...], preferred_element_type=jnp.float32) + be1_ref[...])
        action_ref[...] = jax.nn.sigmoid(
            jnp.sum(hidden * wex_ref[...], axis=-1, keepdims=True) + bex_ref[...])


# ----------------------------------------------------------------------------- #
# Wrapper around pallas_call
# ----------------------------------------------------------------------------- #
def run_fused_bert(x, mask_i32, stacked, head_arrays, n_head):
    B, T, F = x.shape
    L = stacked["wqkv"].shape[0]
    BT = B * T
    x2d = x.reshape(BT, F)
    weights = [stacked[k] for k in _BLOCK_WEIGHT_ORDER]

    in_specs = [
        pl.BlockSpec((BT, F), lambda l: (0, 0)),        # x0 (resident, read at layer 0)
        pl.BlockSpec((B, 1, T), lambda l: (0, 0, 0)),   # key mask (resident)
    ]
    for w in weights:                                   # layer-stacked weights: one layer/step
        in_specs.append(pl.BlockSpec((1,) + w.shape[1:], lambda l: (l, 0, 0)))
    for a in head_arrays:                               # head params + target emb (resident)
        in_specs.append(pl.BlockSpec(a.shape, lambda l: (0, 0)))

    click, action = pl.pallas_call(
        functools.partial(fused_bert_kernel, n_head=n_head, batch=B, seq=T),
        out_shape=(jax.ShapeDtypeStruct((B, 1), jnp.float32),
                   jax.ShapeDtypeStruct((B, 1), jnp.float32)),
        grid=(L,),
        in_specs=in_specs,
        out_specs=(pl.BlockSpec((B, 1), lambda l: (0, 0)),
                   pl.BlockSpec((B, 1), lambda l: (0, 0))),
        scratch_shapes=[pltpu.VMEM((BT, F), jnp.float32)],
        compiler_params=pltpu.CompilerParams(dimension_semantics=("arbitrary",)),
    )(x2d, mask_i32, *weights, *head_arrays)
    return click[:, 0], action[:, 0]          # == torch .squeeze()


# ----------------------------------------------------------------------------- #
# BertIte forward (glue + kernel)
# ----------------------------------------------------------------------------- #
def bert_ite_forward(params, uids, item_sequences, target_items, attention_masks, n_head):
    F = params["embedding_user"].shape[1]

    emb_user = jnp.take(params["embedding_user"], uids, axis=0)        # (B, F)
    uemb = emb_user[:, None, :]                                        # (B, 1, F)

    item_repr_tab = params["embedding_item_repr"]                      # (num_item+1, dim_repr)
    item_tab = params["embedding_item"]                                # (num_item+1, F)
    w_rep = params["emb_rep_i"]                                        # (dim_repr, F), no bias

    seq_reprs = jnp.take(item_repr_tab, item_sequences, axis=0)        # (B, L, dim_repr)
    seq_mix = 0.5 * jnp.take(item_tab, item_sequences, axis=0) + 0.5 * (seq_reprs @ w_rep)

    tgt_reprs = jnp.take(item_repr_tab, target_items, axis=0)          # (B, dim_repr)
    tgt_mix = 0.5 * jnp.take(item_tab, target_items, axis=0) + 0.5 * (tgt_reprs @ w_rep)

    x = jnp.concatenate([uemb, seq_mix], axis=1)                       # (B, T, F), T = L+1
    mask_i32 = attention_masks.astype(jnp.int32)[:, None, :]           # (B, 1, T)

    # Stack per-layer weights on a leading layer axis.
    # Fuse Q/K/V into one (F, 3F) weight; fold 1/sqrt(hs) into the Q columns.
    blocks = params["blocks"]
    scale = jnp.float32(1.0 / math.sqrt(F // n_head))
    stacked = {
        "ln1w": jnp.stack([b["ln1w"] for b in blocks], axis=0),
        "ln1b": jnp.stack([b["ln1b"] for b in blocks], axis=0),
        "ln2w": jnp.stack([b["ln2w"] for b in blocks], axis=0),
        "ln2b": jnp.stack([b["ln2b"] for b in blocks], axis=0),
        "wqkv": jnp.stack([jnp.concatenate(
            [b["wq"] * scale, b["wk"], b["wv"]], axis=-1) for b in blocks], axis=0),
        "bqkv": jnp.stack([jnp.concatenate(
            [b["bq"] * scale, b["bk"], b["bv"]], axis=-1) for b in blocks], axis=0),
        "wp": jnp.stack([b["wp"] for b in blocks], axis=0),
        "bp": jnp.stack([b["bp"] for b in blocks], axis=0),
        "w1": jnp.stack([b["w1"] for b in blocks], axis=0),
        "b1": jnp.stack([b["b1"] for b in blocks], axis=0),
        "w2": jnp.stack([b["w2"] for b in blocks], axis=0),
        "b2": jnp.stack([b["b2"] for b in blocks], axis=0),
    }

    head_arrays = (tgt_mix,
                   params["w_implicit_row"], params["b_implicit"],
                   params["w_explicit1"], params["b_explicit1"],
                   params["w_explicit_row"], params["b_explicit"])

    return run_fused_bert(x, mask_i32, stacked, head_arrays, n_head)


# ----------------------------------------------------------------------------- #
# Pure-JAX reference (mirrors the PyTorch module) for a correctness check
# ----------------------------------------------------------------------------- #
def bert_ite_reference(params, uids, item_sequences, target_items, attention_masks, n_head):
    F = params["embedding_user"].shape[1]
    emb_user = jnp.take(params["embedding_user"], uids, axis=0)[:, None, :]
    item_repr_tab = params["embedding_item_repr"]
    item_tab = params["embedding_item"]
    w_rep = params["emb_rep_i"]
    seq_mix = 0.5 * jnp.take(item_tab, item_sequences, axis=0) \
        + 0.5 * (jnp.take(item_repr_tab, item_sequences, axis=0) @ w_rep)
    tgt_mix = 0.5 * jnp.take(item_tab, target_items, axis=0) \
        + 0.5 * (jnp.take(item_repr_tab, target_items, axis=0) @ w_rep)

    x = jnp.concatenate([emb_user, seq_mix], axis=1)                   # (B, T, F)
    B, T, _ = x.shape
    H = n_head
    d = F // H
    mask4 = attention_masks.astype(jnp.int32)[:, None, None, :]        # (B,1,1,T)

    for blk in params["blocks"]:
        h = _layernorm(x, blk["ln1w"], blk["ln1b"])
        q = (h @ blk["wq"] + blk["bq"]).reshape(B, T, H, d).transpose(0, 2, 1, 3)
        k = (h @ blk["wk"] + blk["bk"]).reshape(B, T, H, d).transpose(0, 2, 1, 3)
        v = (h @ blk["wv"] + blk["bv"]).reshape(B, T, H, d).transpose(0, 2, 1, 3)
        att = jnp.einsum('bhqd,bhkd->bhqk', q, k) * (1.0 / math.sqrt(d))
        att = jnp.where(mask4 == 0, jnp.float32(-1e30), att)
        att = jax.nn.softmax(att, axis=-1)
        y = jnp.einsum('bhqk,bhkd->bhqd', att, v).transpose(0, 2, 1, 3).reshape(B, T, F)
        x = x + (y @ blk["wp"] + blk["bp"])
        h2 = _layernorm(x, blk["ln2w"], blk["ln2b"])
        m = h2 @ blk["w1"] + blk["b1"]
        m = 0.5 * m * (1.0 + lax.erf(m * jnp.float32(1.0 / math.sqrt(2.0))))
        x = x + (m @ blk["w2"] + blk["b2"])

    user_rep = x[:, 0, :]
    ut = user_rep * tgt_mix
    click = jax.nn.sigmoid(jnp.sum(ut * params["w_implicit_row"], axis=-1)
                           + params["b_implicit"][0, 0])
    hidden = jax.nn.sigmoid(ut @ params["w_explicit1"] + params["b_explicit1"])
    action = jax.nn.sigmoid(jnp.sum(hidden * params["w_explicit_row"], axis=-1)
                            + params["b_explicit"][0, 0])
    return click, action


# ----------------------------------------------------------------------------- #
# Deterministic parameter construction
# ----------------------------------------------------------------------------- #
def init_params(key, *, num_user, num_item, num_factor, n_head, n_layer, dim_repr):
    F = num_factor
    H = 2 * num_factor            # hidden_explicit
    keys = iter(jax.random.split(key, 64))

    def nrm(shape, scale=0.02):
        return (scale * jax.random.normal(next(keys), shape)).astype(jnp.float32)

    # item_reprs with an appended all-zero row (padding index = num_item)
    item_reprs = nrm((num_item, dim_repr), 0.1)
    item_reprs = jnp.concatenate([item_reprs, jnp.zeros((1, dim_repr), jnp.float32)], axis=0)

    params = {
        "embedding_user": nrm((num_user, F), 0.1),
        "embedding_item_repr": item_reprs,                 # frozen (from_pretrained)
        "embedding_item": nrm((num_item + 1, F), 0.1),
        "emb_rep_i": nrm((dim_repr, F)),                   # Linear(dim_repr, F, bias=False)
        # heads: single-output Linears stored as rows (used as VPU reduce in-kernel)
        "w_implicit_row": nrm((1, F)), "b_implicit": nrm((1, 1)),
        "w_explicit1": nrm((F, H)), "b_explicit1": nrm((1, H)),
        "w_explicit_row": nrm((1, H)), "b_explicit": nrm((1, 1)),
        "blocks": [],
    }
    for _ in range(n_layer):
        params["blocks"].append({
            "ln1w": jnp.ones((1, F), jnp.float32), "ln1b": jnp.zeros((1, F), jnp.float32),
            "ln2w": jnp.ones((1, F), jnp.float32), "ln2b": jnp.zeros((1, F), jnp.float32),
            "wq": nrm((F, F)), "bq": nrm((1, F)),
            "wk": nrm((F, F)), "bk": nrm((1, F)),
            "wv": nrm((F, F)), "bv": nrm((1, F)),
            "wp": nrm((F, F)), "bp": nrm((1, F)),
            "w1": nrm((F, 4 * F)), "b1": nrm((1, 4 * F)),
            "w2": nrm((4 * F, F)), "b2": nrm((1, F)),
        })
    return params


# ----------------------------------------------------------------------------- #
# Main
# ----------------------------------------------------------------------------- #
if __name__ == "__main__":
    # small config consistent with the module
    NUM_USER, NUM_ITEM = 10, 20
    NUM_FACTOR = 32            # n_embd
    N_HEAD, N_LAYER = 4, 2
    DIM_REPR = 16
    B, L = 2, 7
    T = L + 1                  # user token + item sequence

    key = jax.random.PRNGKey(0)
    k_par, k_u, k_s, k_t, k_m = jax.random.split(key, 5)

    params = init_params(k_par, num_user=NUM_USER, num_item=NUM_ITEM,
                         num_factor=NUM_FACTOR, n_head=N_HEAD,
                         n_layer=N_LAYER, dim_repr=DIM_REPR)

    uids = jax.random.randint(k_u, (B,), 0, NUM_USER)
    item_sequences = jax.random.randint(k_s, (B, L), 0, NUM_ITEM + 1)   # may hit padding row
    target_items = jax.random.randint(k_t, (B,), 0, NUM_ITEM)
    attention_masks = (jax.random.uniform(k_m, (B, T)) > 0.3).astype(jnp.int32)
    attention_masks = attention_masks.at[:, 0].set(1)                   # user token always visible

    fwd = jax.jit(bert_ite_forward, static_argnums=(5,))
    click, action = fwd(params, uids, item_sequences, target_items,
                        attention_masks, N_HEAD)
    jax.block_until_ready((click, action))

    assert click.shape == (B,) and action.shape == (B,)
    assert bool(jnp.all(jnp.isfinite(click))) and bool(jnp.all(jnp.isfinite(action)))

    # correctness check against a pure-JAX reference of the PyTorch forward
    click_ref, action_ref = bert_ite_reference(params, uids, item_sequences,
                                               target_items, attention_masks, N_HEAD)
    assert bool(jnp.allclose(click, click_ref, atol=5e-3, rtol=1e-2)), (click, click_ref)
    assert bool(jnp.allclose(action, action_ref, atol=5e-3, rtol=1e-2)), (action, action_ref)

    print("KERNEL_OK")
</pallas_src>

<mosaic_0001>
module attributes {stable_mosaic.version = 11 : i64} {
  func.func @fused_bert_kernel(%arg0: i32, %arg1: memref<16x32xf32, #tpu.memory_space<vmem>>, %arg2: memref<2x1x8xi32, #tpu.memory_space<vmem>>, %arg3: memref<1x1x32xf32, #tpu.memory_space<vmem>>, %arg4: memref<1x1x32xf32, #tpu.memory_space<vmem>>, %arg5: memref<1x1x32xf32, #tpu.memory_space<vmem>>, %arg6: memref<1x1x32xf32, #tpu.memory_space<vmem>>, %arg7: memref<1x32x96xf32, #tpu.memory_space<vmem>>, %arg8: memref<1x1x96xf32, #tpu.memory_space<vmem>>, %arg9: memref<1x32x32xf32, #tpu.memory_space<vmem>>, %arg10: memref<1x1x32xf32, #tpu.memory_space<vmem>>, %arg11: memref<1x32x128xf32, #tpu.memory_space<vmem>>, %arg12: memref<1x1x128xf32, #tpu.memory_space<vmem>>, %arg13: memref<1x128x32xf32, #tpu.memory_space<vmem>>, %arg14: memref<1x1x32xf32, #tpu.memory_space<vmem>>, %arg15: memref<2x32xf32, #tpu.memory_space<vmem>>, %arg16: memref<1x32xf32, #tpu.memory_space<vmem>>, %arg17: memref<1x1xf32, #tpu.memory_space<vmem>>, %arg18: memref<32x64xf32, #tpu.memory_space<vmem>>, %arg19: memref<1x64xf32, #tpu.memory_space<vmem>>, %arg20: memref<1x64xf32, #tpu.memory_space<vmem>>, %arg21: memref<1x1xf32, #tpu.memory_space<vmem>>, %arg22: memref<2x1xf32, #tpu.memory_space<vmem>>, %arg23: memref<2x1xf32, #tpu.memory_space<vmem>>, %arg24: memref<16x32xf32, #tpu.memory_space<vmem>>) attributes {dimension_semantics = [#tpu.dimension_semantics<arbitrary>], iteration_bounds = array<i64: 2>, scalar_prefetch = 0 : i64, scratch_operands = 1 : i64, tpu.core_type = #tpu.core_type<tc>, window_params = [{pipeline_mode = #tpu.pipeline_mode<synchronous>, transform_indices = @transform_0, window_bounds = array<i64: 16, 32>}, {pipeline_mode = #tpu.pipeline_mode<synchronous>, transform_indices = @transform_1, window_bounds = array<i64: 2, 1, 8>}, {transform_indices = @transform_2, window_bounds = array<i64: 1, 1, 32>}, {transform_indices = @transform_3, window_bounds = array<i64: 1, 1, 32>}, {transform_indices = @transform_4, window_bounds = array<i64: 1, 1, 32>}, {transform_indices = @transform_5, window_bounds = array<i64: 1, 1, 32>}, {transform_indices = @transform_6, window_bounds = array<i64: 1, 32, 96>}, {transform_indices = @transform_7, window_bounds = array<i64: 1, 1, 96>}, {transform_indices = @transform_8, window_bounds = array<i64: 1, 32, 32>}, {transform_indices = @transform_9, window_bounds = array<i64: 1, 1, 32>}, {transform_indices = @transform_10, window_bounds = array<i64: 1, 32, 128>}, {transform_indices = @transform_11, window_bounds = array<i64: 1, 1, 128>}, {transform_indices = @transform_12, window_bounds = array<i64: 1, 128, 32>}, {transform_indices = @transform_13, window_bounds = array<i64: 1, 1, 32>}, {pipeline_mode = #tpu.pipeline_mode<synchronous>, transform_indices = @transform_14, window_bounds = array<i64: 2, 32>}, {pipeline_mode = #tpu.pipeline_mode<synchronous>, transform_indices = @transform_15, window_bounds = array<i64: 1, 32>}, {pipeline_mode = #tpu.pipeline_mode<synchronous>, transform_indices = @transform_16, window_bounds = array<i64: 1, 1>}, {pipeline_mode = #tpu.pipeline_mode<synchronous>, transform_indices = @transform_17, window_bounds = array<i64: 32, 64>}, {pipeline_mode = #tpu.pipeline_mode<synchronous>, transform_indices = @transform_18, window_bounds = array<i64: 1, 64>}, {pipeline_mode = #tpu.pipeline_mode<synchronous>, transform_indices = @transform_19, window_bounds = array<i64: 1, 64>}, {pipeline_mode = #tpu.pipeline_mode<synchronous>, transform_indices = @transform_20, window_bounds = array<i64: 1, 1>}, {pipeline_mode = #tpu.pipeline_mode<synchronous>, transform_indices = @transform_21, window_bounds = array<i64: 2, 1>}, {pipeline_mode = #tpu.pipeline_mode<synchronous>, transform_indices = @transform_22, window_bounds = array<i64: 2, 1>}]} {
    %c0_i32 = arith.constant 0 : i32
    %0 = arith.cmpi eq, %arg0, %c0_i32 : i32
    %1 = arith.extui %0 : i1 to i32
    %c0_i32_0 = arith.constant 0 : i32
    %2 = arith.cmpi ne, %1, %c0_i32_0 : i32
    scf.if %2 {
      %c0_85 = arith.constant 0 : index
      %c0_86 = arith.constant 0 : index
      %194 = vector.load %arg1[%c0_85, %c0_86] : memref<16x32xf32, #tpu.memory_space<vmem>>, vector<16x32xf32>
      %c0_87 = arith.constant 0 : index
      %c0_88 = arith.constant 0 : index
      %195 = vector.load %arg24[%c0_87, %c0_88] : memref<16x32xf32, #tpu.memory_space<vmem>>, vector<16x32xf32>
      tpu.vector_store %arg24[%c0_87, %c0_88], %194 {strides = array<i32>} : memref<16x32xf32, #tpu.memory_space<vmem>>, vector<16x32xf32>,
    } else {
    }
    %c0 = arith.constant 0 : index
    %c0_1 = arith.constant 0 : index
    %3 = vector.load %arg24[%c0, %c0_1] : memref<16x32xf32, #tpu.memory_space<vmem>>, vector<16x32xf32>
    %c0_2 = arith.constant 0 : index
    %c0_3 = arith.constant 0 : index
    %c0_4 = arith.constant 0 : index
    %4 = vector.load %arg3[%c0_2, %c0_3, %c0_4] : memref<1x1x32xf32, #tpu.memory_space<vmem>>, vector<1x1x32xf32>
    %5 = vector.shape_cast %4 : vector<1x1x32xf32> to vector<1x32xf32>
    %c0_5 = arith.constant 0 : index
    %c0_6 = arith.constant 0 : index
    %c0_7 = arith.constant 0 : index
    %6 = vector.load %arg4[%c0_5, %c0_6, %c0_7] : memref<1x1x32xf32, #tpu.memory_space<vmem>>, vector<1x1x32xf32>
    %7 = vector.shape_cast %6 : vector<1x1x32xf32> to vector<1x32xf32>
    %cst = arith.constant dense<0.000000e+00> : vector<16xf32>
    %8 = vector.multi_reduction <add>, %3, %cst [1] : vector<16x32xf32> to vector<16xf32>
    %9 = vector.shape_cast %8 : vector<16xf32> to vector<16x1xf32>
    %cst_8 = arith.constant 3.200000e+01 : f32
    %10 = vector.broadcast %cst_8 : f32 to vector<16x1xf32>
    %11 = arith.divf %9, %10 : vector<16x1xf32>
    %12 = vector.broadcast %11 : vector<16x1xf32> to vector<16x32xf32>
    %13 = arith.subf %3, %12 : vector<16x32xf32>
    %14 = arith.mulf %13, %13 : vector<16x32xf32>
    %cst_9 = arith.constant dense<0.000000e+00> : vector<16xf32>
    %15 = vector.multi_reduction <add>, %14, %cst_9 [1] : vector<16x32xf32> to vector<16xf32>
    %16 = vector.shape_cast %15 : vector<16xf32> to vector<16x1xf32>
    %cst_10 = arith.constant 3.200000e+01 : f32
    %17 = vector.broadcast %cst_10 : f32 to vector<16x1xf32>
    %18 = arith.divf %16, %17 : vector<16x1xf32>
    %19 = vector.broadcast %11 : vector<16x1xf32> to vector<16x32xf32>
    %20 = arith.subf %3, %19 : vector<16x32xf32>
    %cst_11 = arith.constant 9.99999974E-6 : f32
    %21 = vector.broadcast %cst_11 : f32 to vector<16x1xf32>
    %22 = arith.addf %18, %21 : vector<16x1xf32>
    %23 = math.rsqrt %22 : vector<16x1xf32>
    %24 = vector.broadcast %23 : vector<16x1xf32> to vector<16x32xf32>
    %25 = arith.mulf %20, %24 : vector<16x32xf32>
    %26 = vector.broadcast %5 : vector<1x32xf32> to vector<16x32xf32>
    %27 = arith.mulf %25, %26 : vector<16x32xf32>
    %28 = vector.broadcast %7 : vector<1x32xf32> to vector<16x32xf32>
    %29 = arith.addf %27, %28 : vector<16x32xf32>
    %c0_12 = arith.constant 0 : index
    %c0_13 = arith.constant 0 : index
    %c0_14 = arith.constant 0 : index
    %30 = vector.load %arg7[%c0_12, %c0_13, %c0_14] : memref<1x32x96xf32, #tpu.memory_space<vmem>>, vector<1x32x96xf32>
    %31 = vector.shape_cast %30 : vector<1x32x96xf32> to vector<32x96xf32>
    %cst_15 = arith.constant dense<0.000000e+00> : vector<16x96xf32>
    %32 = tpu.matmul %29, %31, %cst_15 {dimension_numbers = #tpu.dot_dimension_numbers<[1], [0], [0], [1], [0, 0, 1, 1], [], []>} : vector<16x32xf32>, vector<32x96xf32>, vector<16x96xf32> -> vector<16x96xf32>
    %c0_16 = arith.constant 0 : index
    %c0_17 = arith.constant 0 : index
    %c0_18 = arith.constant 0 : index
    %33 = vector.load %arg8[%c0_16, %c0_17, %c0_18] : memref<1x1x96xf32, #tpu.memory_space<vmem>>, vector<1x1x96xf32>
    %34 = vector.shape_cast %33 : vector<1x1x96xf32> to vector<1x96xf32>
    %35 = vector.broadcast %34 : vector<1x96xf32> to vector<16x96xf32>
    %36 = arith.addf %32, %35 : vector<16x96xf32>
    %37 = vector.shape_cast %36 : vector<16x96xf32> to vector<2x8x96xf32>
    %c0_19 = arith.constant 0 : index
    %c0_20 = arith.constant 0 : index
    %c0_21 = arith.constant 0 : index
    %38 = vector.load %arg2[%c0_19, %c0_20, %c0_21] : memref<2x1x8xi32, #tpu.memory_space<vmem>>, vector<2x1x8xi32>
    %c0_i32_22 = arith.constant 0 : i32
    %39 = vector.broadcast %c0_i32_22 : i32 to vector<2x1x8xi32>
    %40 = arith.cmpi eq, %38, %39 : vector<2x1x8xi32>
    %c0_23 = arith.constant 0 : index
    %c0_24 = arith.constant 0 : index
    %c0_25 = arith.constant 0 : index
    %41 = vector.load %arg9[%c0_23, %c0_24, %c0_25] : memref<1x32x32xf32, #tpu.memory_space<vmem>>, vector<1x32x32xf32>
    %42 = vector.shape_cast %41 : vector<1x32x32xf32> to vector<32x32xf32>
    %cst_26 = arith.constant 0.000000e+00 : f32
    %43 = vector.broadcast %cst_26 : f32 to vector<16x32xf32>
    %44 = vector.extract_strided_slice %37 {offsets = [0, 0, 0], sizes = [2, 8, 8], strides = [1, 1, 1]} : vector<2x8x96xf32> to vector<2x8x8xf32>
    %45 = vector.extract_strided_slice %37 {offsets = [0, 0, 32], sizes = [2, 8, 8], strides = [1, 1, 1]} : vector<2x8x96xf32> to vector<2x8x8xf32>
    %46 = vector.extract_strided_slice %37 {offsets = [0, 0, 64], sizes = [2, 8, 8], strides = [1, 1, 1]} : vector<2x8x96xf32> to vector<2x8x8xf32>
    "tpu.trace_start"() <{level = 10 : i32, message = "bqd,bkd->bqk"}> : () -> ()
    %cst_27 = arith.constant dense<0.000000e+00> : vector<2x8x8xf32>
    %47 = tpu.matmul %44, %45, %cst_27 {dimension_numbers = #tpu.dot_dimension_numbers<[2], [2], [1], [1], [0, 0, 0, 1, 1, 1], [0], [0]>} : vector<2x8x8xf32>, vector<2x8x8xf32>, vector<2x8x8xf32> -> vector<2x8x8xf32>
    %cst_28 = arith.constant -1.000000e+30 : f32
    "tpu.trace_stop"() : () -> ()
    %48 = vector.shape_cast %40 : vector<2x1x8xi1> to vector<2x1x8xi1>
    %49 = vector.broadcast %48 : vector<2x1x8xi1> to vector<2x8x8xi1>
    %50 = vector.broadcast %cst_28 : f32 to vector<2x8x8xf32>
    %51 = arith.select %49, %50, %47 : vector<2x8x8xi1>, vector<2x8x8xf32>
    %cst_29 = arith.constant dense<0xFF800000> : vector<2x8xf32>
    %52 = vector.multi_reduction <maximumf>, %51, %cst_29 [2] : vector<2x8x8xf32> to vector<2x8xf32>
    %53 = vector.shape_cast %52 : vector<2x8xf32> to vector<2x8x1xf32>
    %54 = vector.broadcast %53 : vector<2x8x1xf32> to vector<2x8x8xf32>
    %55 = arith.subf %51, %54 : vector<2x8x8xf32>
    %56 = math.exp %55 : vector<2x8x8xf32>
    %cst_30 = arith.constant dense<0.000000e+00> : vector<2x8xf32>
    %57 = vector.multi_reduction <add>, %56, %cst_30 [2] : vector<2x8x8xf32> to vector<2x8xf32>
    %58 = vector.shape_cast %57 : vector<2x8xf32> to vector<2x8x1xf32>
    %59 = tpu.reciprocal %58 {approx = true} : vector<2x8x1xf32> -> vector<2x8x1xf32>
    %60 = vector.broadcast %59 : vector<2x8x1xf32> to vector<2x8x8xf32>
    %61 = arith.mulf %56, %60 : vector<2x8x8xf32>
    "tpu.trace_start"() <{level = 10 : i32, message = "bqk,bkd->bqd"}> : () -> ()
    %cst_31 = arith.constant dense<0.000000e+00> : vector<2x8x8xf32>
    %62 = tpu.matmul %61, %46, %cst_31 {dimension_numbers = #tpu.dot_dimension_numbers<[2], [1], [1], [2], [0, 0, 0, 1, 1, 2], [0], [0]>} : vector<2x8x8xf32>, vector<2x8x8xf32>, vector<2x8x8xf32> -> vector<2x8x8xf32>
    "tpu.trace_stop"() : () -> ()
    %63 = vector.shape_cast %62 : vector<2x8x8xf32> to vector<16x8xf32>
    %64 = vector.extract_strided_slice %42 {offsets = [0, 0], sizes = [8, 32], strides = [1, 1]} : vector<32x32xf32> to vector<8x32xf32>
    %cst_32 = arith.constant dense<0.000000e+00> : vector<16x32xf32>
    %65 = tpu.matmul %63, %64, %cst_32 {dimension_numbers = #tpu.dot_dimension_numbers<[1], [0], [0], [1], [0, 0, 1, 1], [], []>} : vector<16x8xf32>, vector<8x32xf32>, vector<16x32xf32> -> vector<16x32xf32>
    %66 = arith.addf %43, %65 : vector<16x32xf32>
    %67 = vector.extract_strided_slice %37 {offsets = [0, 0, 8], sizes = [2, 8, 8], strides = [1, 1, 1]} : vector<2x8x96xf32> to vector<2x8x8xf32>
    %68 = vector.extract_strided_slice %37 {offsets = [0, 0, 40], sizes = [2, 8, 8], strides = [1, 1, 1]} : vector<2x8x96xf32> to vector<2x8x8xf32>
    %69 = vector.extract_strided_slice %37 {offsets = [0, 0, 72], sizes = [2, 8, 8], strides = [1, 1, 1]} : vector<2x8x96xf32> to vector<2x8x8xf32>
    "tpu.trace_start"() <{level = 10 : i32, message = "bqd,bkd->bqk"}> : () -> ()
    %cst_33 = arith.constant dense<0.000000e+00> : vector<2x8x8xf32>
    %70 = tpu.matmul %67, %68, %cst_33 {dimension_numbers = #tpu.dot_dimension_numbers<[2], [2], [1], [1], [0, 0, 0, 1, 1, 1], [0], [0]>} : vector<2x8x8xf32>, vector<2x8x8xf32>, vector<2x8x8xf32> -> vector<2x8x8xf32>
    %cst_34 = arith.constant -1.000000e+30 : f32
    "tpu.trace_stop"() : () -> ()
    %71 = vector.shape_cast %40 : vector<2x1x8xi1> to vector<2x1x8xi1>
    %72 = vector.broadcast %71 : vector<2x1x8xi1> to vector<2x8x8xi1>
    %73 = vector.broadcast %cst_34 : f32 to vector<2x8x8xf32>
    %74 = arith.select %72, %73, %70 : vector<2x8x8xi1>, vector<2x8x8xf32>
    %cst_35 = arith.constant dense<0xFF800000> : vector<2x8xf32>
    %75 = vector.multi_reduction <maximumf>, %74, %cst_35 [2] : vector<2x8x8xf32> to vector<2x8xf32>
    %76 = vector.shape_cast %75 : vector<2x8xf32> to vector<2x8x1xf32>
    %77 = vector.broadcast %76 : vector<2x8x1xf32> to vector<2x8x8xf32>
    %78 = arith.subf %74, %77 : vector<2x8x8xf32>
    %79 = math.exp %78 : vector<2x8x8xf32>
    %cst_36 = arith.constant dense<0.000000e+00> : vector<2x8xf32>
    %80 = vector.multi_reduction <add>, %79, %cst_36 [2] : vector<2x8x8xf32> to vector<2x8xf32>
    %81 = vector.shape_cast %80 : vector<2x8xf32> to vector<2x8x1xf32>
    %82 = tpu.reciprocal %81 {approx = true} : vector<2x8x1xf32> -> vector<2x8x1xf32>
    %83 = vector.broadcast %82 : vector<2x8x1xf32> to vector<2x8x8xf32>
    %84 = arith.mulf %79, %83 : vector<2x8x8xf32>
    "tpu.trace_start"() <{level = 10 : i32, message = "bqk,bkd->bqd"}> : () -> ()
    %cst_37 = arith.constant dense<0.000000e+00> : vector<2x8x8xf32>
    %85 = tpu.matmul %84, %69, %cst_37 {dimension_numbers = #tpu.dot_dimension_numbers<[2], [1], [1], [2], [0, 0, 0, 1, 1, 2], [0], [0]>} : vector<2x8x8xf32>, vector<2x8x8xf32>, vector<2x8x8xf32> -> vector<2x8x8xf32>
    "tpu.trace_stop"() : () -> ()
    %86 = vector.shape_cast %85 : vector<2x8x8xf32> to vector<16x8xf32>
    %87 = vector.extract_strided_slice %42 {offsets = [8, 0], sizes = [8, 32], strides = [1, 1]} : vector<32x32xf32> to vector<8x32xf32>
    %cst_38 = arith.constant dense<0.000000e+00> : vector<16x32xf32>
    %88 = tpu.matmul %86, %87, %cst_38 {dimension_numbers = #tpu.dot_dimension_numbers<[1], [0], [0], [1], [0, 0, 1, 1], [], []>} : vector<16x8xf32>, vector<8x32xf32>, vector<16x32xf32> -> vector<16x32xf32>
    %89 = arith.addf %66, %88 : vector<16x32xf32>
    %90 = vector.extract_strided_slice %37 {offsets = [0, 0, 16], sizes = [2, 8, 8], strides = [1, 1, 1]} : vector<2x8x96xf32> to vector<2x8x8xf32>
    %91 = vector.extract_strided_slice %37 {offsets = [0, 0, 48], sizes = [2, 8, 8], strides = [1, 1, 1]} : vector<2x8x96xf32> to vector<2x8x8xf32>
    %92 = vector.extract_strided_slice %37 {offsets = [0, 0, 80], sizes = [2, 8, 8], strides = [1, 1, 1]} : vector<2x8x96xf32> to vector<2x8x8xf32>
    "tpu.trace_start"() <{level = 10 : i32, message = "bqd,bkd->bqk"}> : () -> ()
    %cst_39 = arith.constant dense<0.000000e+00> : vector<2x8x8xf32>
    %93 = tpu.matmul %90, %91, %cst_39 {dimension_numbers = #tpu.dot_dimension_numbers<[2], [2], [1], [1], [0, 0, 0, 1, 1, 1], [0], [0]>} : vector<2x8x8xf32>, vector<2x8x8xf32>, vector<2x8x8xf32> -> vector<2x8x8xf32>
    %cst_40 = arith.constant -1.000000e+30 : f32
    "tpu.trace_stop"() : () -> ()
    %94 = vector.shape_cast %40 : vector<2x1x8xi1> to vector<2x1x8xi1>
    %95 = vector.broadcast %94 : vector<2x1x8xi1> to vector<2x8x8xi1>
    %96 = vector.broadcast %cst_40 : f32 to vector<2x8x8xf32>
    %97 = arith.select %95, %96, %93 : vector<2x8x8xi1>, vector<2x8x8xf32>
    %cst_41 = arith.constant dense<0xFF800000> : vector<2x8xf32>
    %98 = vector.multi_reduction <maximumf>, %97, %cst_41 [2] : vector<2x8x8xf32> to vector<2x8xf32>
    %99 = vector.shape_cast %98 : vector<2x8xf32> to vector<2x8x1xf32>
    %100 = vector.broadcast %99 : vector<2x8x1xf32> to vector<2x8x8xf32>
    %101 = arith.subf %97, %100 : vector<2x8x8xf32>
    %102 = math.exp %101 : vector<2x8x8xf32>
    %cst_42 = arith.constant dense<0.000000e+00> : vector<2x8xf32>
    %103 = vector.multi_reduction <add>, %102, %cst_42 [2] : vector<2x8x8xf32> to vector<2x8xf32>
    %104 = vector.shape_cast %103 : vector<2x8xf32> to vector<2x8x1xf32>
    %105 = tpu.reciprocal %104 {approx = true} : vector<2x8x1xf32> -> vector<2x8x1xf32>
    %106 = vector.broadcast %105 : vector<2x8x1xf32> to vector<2x8x8xf32>
    %107 = arith.mulf %102, %106 : vector<2x8x8xf32>
    "tpu.trace_start"() <{level = 10 : i32, message = "bqk,bkd->bqd"}> : () -> ()
    %cst_43 = arith.constant dense<0.000000e+00> : vector<2x8x8xf32>
    %108 = tpu.matmul %107, %92, %cst_43 {dimension_numbers = #tpu.dot_dimension_numbers<[2], [1], [1], [2], [0, 0, 0, 1, 1, 2], [0], [0]>} : vector<2x8x8xf32>, vector<2x8x8xf32>, vector<2x8x8xf32> -> vector<2x8x8xf32>
    "tpu.trace_stop"() : () -> ()
    %109 = vector.shape_cast %108 : vector<2x8x8xf32> to vector<16x8xf32>
    %110 = vector.extract_strided_slice %42 {offsets = [16, 0], sizes = [8, 32], strides = [1, 1]} : vector<32x32xf32> to vector<8x32xf32>
    %cst_44 = arith.constant dense<0.000000e+00> : vector<16x32xf32>
    %111 = tpu.matmul %109, %110, %cst_44 {dimension_numbers = #tpu.dot_dimension_numbers<[1], [0], [0], [1], [0, 0, 1, 1], [], []>} : vector<16x8xf32>, vector<8x32xf32>, vector<16x32xf32> -> vector<16x32xf32>
    %112 = arith.addf %89, %111 : vector<16x32xf32>
    %113 = vector.extract_strided_slice %37 {offsets = [0, 0, 24], sizes = [2, 8, 8], strides = [1, 1, 1]} : vector<2x8x96xf32> to vector<2x8x8xf32>
    %114 = vector.extract_strided_slice %37 {offsets = [0, 0, 56], sizes = [2, 8, 8], strides = [1, 1, 1]} : vector<2x8x96xf32> to vector<2x8x8xf32>
    %115 = vector.extract_strided_slice %37 {offsets = [0, 0, 88], sizes = [2, 8, 8], strides = [1, 1, 1]} : vector<2x8x96xf32> to vector<2x8x8xf32>
    "tpu.trace_start"() <{level = 10 : i32, message = "bqd,bkd->bqk"}> : () -> ()
    %cst_45 = arith.constant dense<0.000000e+00> : vector<2x8x8xf32>
    %116 = tpu.matmul %113, %114, %cst_45 {dimension_numbers = #tpu.dot_dimension_numbers<[2], [2], [1], [1], [0, 0, 0, 1, 1, 1], [0], [0]>} : vector<2x8x8xf32>, vector<2x8x8xf32>, vector<2x8x8xf32> -> vector<2x8x8xf32>
    %cst_46 = arith.constant -1.000000e+30 : f32
    "tpu.trace_stop"() : () -> ()
    %117 = vector.shape_cast %40 : vector<2x1x8xi1> to vector<2x1x8xi1>
    %118 = vector.broadcast %117 : vector<2x1x8xi1> to vector<2x8x8xi1>
    %119 = vector.broadcast %cst_46 : f32 to vector<2x8x8xf32>
    %120 = arith.select %118, %119, %116 : vector<2x8x8xi1>, vector<2x8x8xf32>
    %cst_47 = arith.constant dense<0xFF800000> : vector<2x8xf32>
    %121 = vector.multi_reduction <maximumf>, %120, %cst_47 [2] : vector<2x8x8xf32> to vector<2x8xf32>
    %122 = vector.shape_cast %121 : vector<2x8xf32> to vector<2x8x1xf32>
    %123 = vector.broadcast %122 : vector<2x8x1xf32> to vector<2x8x8xf32>
    %124 = arith.subf %120, %123 : vector<2x8x8xf32>
    %125 = math.exp %124 : vector<2x8x8xf32>
    %cst_48 = arith.constant dense<0.000000e+00> : vector<2x8xf32>
    %126 = vector.multi_reduction <add>, %125, %cst_48 [2] : vector<2x8x8xf32> to vector<2x8xf32>
    %127 = vector.shape_cast %126 : vector<2x8xf32> to vector<2x8x1xf32>
    %128 = tpu.reciprocal %127 {approx = true} : vector<2x8x1xf32> -> vector<2x8x1xf32>
    %129 = vector.broadcast %128 : vector<2x8x1xf32> to vector<2x8x8xf32>
    %130 = arith.mulf %125, %129 : vector<2x8x8xf32>
    "tpu.trace_start"() <{level = 10 : i32, message = "bqk,bkd->bqd"}> : () -> ()
    %cst_49 = arith.constant dense<0.000000e+00> : vector<2x8x8xf32>
    %131 = tpu.matmul %130, %115, %cst_49 {dimension_numbers = #tpu.dot_dimension_numbers<[2], [1], [1], [2], [0, 0, 0, 1, 1, 2], [0], [0]>} : vector<2x8x8xf32>, vector<2x8x8xf32>, vector<2x8x8xf32> -> vector<2x8x8xf32>
    "tpu.trace_stop"() : () -> ()
    %132 = vector.shape_cast %131 : vector<2x8x8xf32> to vector<16x8xf32>
    %133 = vector.extract_strided_slice %42 {offsets = [24, 0], sizes = [8, 32], strides = [1, 1]} : vector<32x32xf32> to vector<8x32xf32>
    %cst_50 = arith.constant dense<0.000000e+00> : vector<16x32xf32>
    %134 = tpu.matmul %132, %133, %cst_50 {dimension_numbers = #tpu.dot_dimension_numbers<[1], [0], [0], [1], [0, 0, 1, 1], [], []>} : vector<16x8xf32>, vector<8x32xf32>, vector<16x32xf32> -> vector<16x32xf32>
    %135 = arith.addf %112, %134 : vector<16x32xf32>
    %136 = arith.addf %3, %135 : vector<16x32xf32>
    %c0_51 = arith.constant 0 : index
    %c0_52 = arith.constant 0 : index
    %c0_53 = arith.constant 0 : index
    %137 = vector.load %arg10[%c0_51, %c0_52, %c0_53] : memref<1x1x32xf32, #tpu.memory_space<vmem>>, vector<1x1x32xf32>
    %138 = vector.shape_cast %137 : vector<1x1x32xf32> to vector<1x32xf32>
    %139 = vector.broadcast %138 : vector<1x32xf32> to vector<16x32xf32>
    %140 = arith.addf %136, %139 : vector<16x32xf32>
    %c0_54 = arith.constant 0 : index
    %c0_55 = arith.constant 0 : index
    %c0_56 = arith.constant 0 : index
    %141 = vector.load %arg5[%c0_54, %c0_55, %c0_56] : memref<1x1x32xf32, #tpu.memory_space<vmem>>, vector<1x1x32xf32>
    %142 = vector.shape_cast %141 : vector<1x1x32xf32> to vector<1x32xf32>
    %c0_57 = arith.constant 0 : index
    %c0_58 = arith.constant 0 : index
    %c0_59 = arith.constant 0 : index
    %143 = vector.load %arg6[%c0_57, %c0_58, %c0_59] : memref<1x1x32xf32, #tpu.memory_space<vmem>>, vector<1x1x32xf32>
    %144 = vector.shape_cast %143 : vector<1x1x32xf32> to vector<1x32xf32>
    %cst_60 = arith.constant dense<0.000000e+00> : vector<16xf32>
    %145 = vector.multi_reduction <add>, %140, %cst_60 [1] : vector<16x32xf32> to vector<16xf32>
    %146 = vector.shape_cast %145 : vector<16xf32> to vector<16x1xf32>
    %cst_61 = arith.constant 3.200000e+01 : f32
    %147 = vector.broadcast %cst_61 : f32 to vector<16x1xf32>
    %148 = arith.divf %146, %147 : vector<16x1xf32>
    %149 = vector.broadcast %148 : vector<16x1xf32> to vector<16x32xf32>
    %150 = arith.subf %140, %149 : vector<16x32xf32>
    %151 = arith.mulf %150, %150 : vector<16x32xf32>
    %cst_62 = arith.constant dense<0.000000e+00> : vector<16xf32>
    %152 = vector.multi_reduction <add>, %151, %cst_62 [1] : vector<16x32xf32> to vector<16xf32>
    %153 = vector.shape_cast %152 : vector<16xf32> to vector<16x1xf32>
    %cst_63 = arith.constant 3.200000e+01 : f32
    %154 = vector.broadcast %cst_63 : f32 to vector<16x1xf32>
    %155 = arith.divf %153, %154 : vector<16x1xf32>
    %156 = vector.broadcast %148 : vector<16x1xf32> to vector<16x32xf32>
    %157 = arith.subf %140, %156 : vector<16x32xf32>
    %cst_64 = arith.constant 9.99999974E-6 : f32
    %158 = vector.broadcast %cst_64 : f32 to vector<16x1xf32>
    %159 = arith.addf %155, %158 : vector<16x1xf32>
    %160 = math.rsqrt %159 : vector<16x1xf32>
    %161 = vector.broadcast %160 : vector<16x1xf32> to vector<16x32xf32>
    %162 = arith.mulf %157, %161 : vector<16x32xf32>
    %163 = vector.broadcast %142 : vector<1x32xf32> to vector<16x32xf32>
    %164 = arith.mulf %162, %163 : vector<16x32xf32>
    %165 = vector.broadcast %144 : vector<1x32xf32> to vector<16x32xf32>
    %166 = arith.addf %164, %165 : vector<16x32xf32>
    %c0_65 = arith.constant 0 : index
    %c0_66 = arith.constant 0 : index
    %c0_67 = arith.constant 0 : index
    %167 = vector.load %arg11[%c0_65, %c0_66, %c0_67] : memref<1x32x128xf32, #tpu.memory_space<vmem>>, vector<1x32x128xf32>
    %168 = vector.shape_cast %167 : vector<1x32x128xf32> to vector<32x128xf32>
    %cst_68 = arith.constant dense<0.000000e+00> : vector<16x128xf32>
    %169 = tpu.matmul %166, %168, %cst_68 {dimension_numbers = #tpu.dot_dimension_numbers<[1], [0], [0], [1], [0, 0, 1, 1], [], []>} : vector<16x32xf32>, vector<32x128xf32>, vector<16x128xf32> -> vector<16x128xf32>
    %c0_69 = arith.constant 0 : index
    %c0_70 = arith.constant 0 : index
    %c0_71 = arith.constant 0 : index
    %170 = vector.load %arg12[%c0_69, %c0_70, %c0_71] : memref<1x1x128xf32, #tpu.memory_space<vmem>>, vector<1x1x128xf32>
    %171 = vector.shape_cast %170 : vector<1x1x128xf32> to vector<1x128xf32>
    %172 = vector.broadcast %171 : vector<1x128xf32> to vector<16x128xf32>
    %173 = arith.addf %169, %172 : vector<16x128xf32>
    %cst_72 = arith.constant 5.000000e-01 : f32
    %174 = vector.broadcast %cst_72 : f32 to vector<16x128xf32>
    %175 = arith.mulf %174, %173 : vector<16x128xf32>
    %cst_73 = arith.constant 0.707106769 : f32
    %176 = vector.broadcast %cst_73 : f32 to vector<16x128xf32>
    %177 = arith.mulf %173, %176 : vector<16x128xf32>
    %178 = math.erf %177 : vector<16x128xf32>
    %cst_74 = arith.constant 1.000000e+00 : f32
    %179 = vector.broadcast %cst_74 : f32 to vector<16x128xf32>
    %180 = arith.addf %179, %178 : vector<16x128xf32>
    %181 = arith.mulf %175, %180 : vector<16x128xf32>
    %c0_75 = arith.constant 0 : index
    %c0_76 = arith.constant 0 : index
    %c0_77 = arith.constant 0 : index
    %182 = vector.load %arg13[%c0_75, %c0_76, %c0_77] : memref<1x128x32xf32, #tpu.memory_space<vmem>>, vector<1x128x32xf32>
    %183 = vector.shape_cast %182 : vector<1x128x32xf32> to vector<128x32xf32>
    %cst_78 = arith.constant dense<0.000000e+00> : vector<16x32xf32>
    %184 = tpu.matmul %181, %183, %cst_78 {dimension_numbers = #tpu.dot_dimension_numbers<[1], [0], [0], [1], [0, 0, 1, 1], [], []>} : vector<16x128xf32>, vector<128x32xf32>, vector<16x32xf32> -> vector<16x32xf32>
    %c0_79 = arith.constant 0 : index
    %c0_80 = arith.constant 0 : index
    %c0_81 = arith.constant 0 : index
    %185 = vector.load %arg14[%c0_79, %c0_80, %c0_81] : memref<1x1x32xf32, #tpu.memory_space<vmem>>, vector<1x1x32xf32>
    %186 = vector.shape_cast %185 : vector<1x1x32xf32> to vector<1x32xf32>
    %187 = vector.broadcast %186 : vector<1x32xf32> to vector<16x32xf32>
    %188 = arith.addf %184, %187 : vector<16x32xf32>
    %189 = arith.addf %140, %188 : vector<16x32xf32>
    %c0_82 = arith.constant 0 : index
    %c0_83 = arith.constant 0 : index
    %190 = vector.load %arg24[%c0_82, %c0_83] : memref<16x32xf32, #tpu.memory_space<vmem>>, vector<16x32xf32>
    tpu.vector_store %arg24[%c0_82, %c0_83], %189 {strides = array<i32>} : memref<16x32xf32, #tpu.memory_space<vmem>>, vector<16x32xf32>,
    %c1_i32 = arith.constant 1 : i32
    %191 = arith.cmpi eq, %arg0, %c1_i32 : i32
    %192 = arith.extui %191 : i1 to i32
    %c0_i32_84 = arith.constant 0 : i32
    %193 = arith.cmpi ne, %192, %c0_i32_84 : i32
    scf.if %193 {
      %194 = vector.shape_cast %189 : vector<16x32xf32> to vector<2x8x32xf32>
      %195 = vector.extract_strided_slice %194 {offsets = [0, 0, 0], sizes = [2, 1, 32], strides = [1, 1, 1]} : vector<2x8x32xf32> to vector<2x1x32xf32>
      %196 = vector.shape_cast %195 : vector<2x1x32xf32> to vector<2x32xf32>
      %c0_85 = arith.constant 0 : index
      %c0_86 = arith.constant 0 : index
      %197 = vector.load %arg15[%c0_85, %c0_86] : memref<2x32xf32, #tpu.memory_space<vmem>>, vector<2x32xf32>
      %198 = arith.mulf %196, %197 : vector<2x32xf32>
      %c0_87 = arith.constant 0 : index
      %c0_88 = arith.constant 0 : index
      %199 = vector.load %arg16[%c0_87, %c0_88] : memref<1x32xf32, #tpu.memory_space<vmem>>, vector<1x32xf32>
      %200 = vector.broadcast %199 : vector<1x32xf32> to vector<2x32xf32>
      %201 = arith.mulf %198, %200 : vector<2x32xf32>
      %cst_89 = arith.constant dense<0.000000e+00> : vector<2xf32>
      %202 = vector.multi_reduction <add>, %201, %cst_89 [1] : vector<2x32xf32> to vector<2xf32>
      %203 = vector.shape_cast %202 : vector<2xf32> to vector<2x1xf32>
      %c0_90 = arith.constant 0 : index
      %c0_91 = arith.constant 0 : index
      %204 = vector.load %arg17[%c0_90, %c0_91] : memref<1x1xf32, #tpu.memory_space<vmem>>, vector<1x1xf32>
      %205 = vector.broadcast %204 : vector<1x1xf32> to vector<2x1xf32>
      %206 = arith.addf %203, %205 : vector<2x1xf32>
      %207 = arith.negf %206 : vector<2x1xf32>
      %208 = math.exp %207 : vector<2x1xf32>
      %cst_92 = arith.constant 1.000000e+00 : f32
      %209 = vector.broadcast %cst_92 : f32 to vector<2x1xf32>
      %210 = arith.addf %209, %208 : vector<2x1xf32>
      %211 = arith.divf %209, %210 : vector<2x1xf32>
      %c0_93 = arith.constant 0 : index
      %c0_94 = arith.constant 0 : index
      %212 = vector.load %arg22[%c0_93, %c0_94] : memref<2x1xf32, #tpu.memory_space<vmem>>, vector<2x1xf32>
      tpu.vector_store %arg22[%c0_93, %c0_94], %211 {strides = array<i32>} : memref<2x1xf32, #tpu.memory_space<vmem>>, vector<2x1xf32>,
      %c0_95 = arith.constant 0 : index
      %c0_96 = arith.constant 0 : index
      %213 = vector.load %arg18[%c0_95, %c0_96] : memref<32x64xf32, #tpu.memory_space<vmem>>, vector<32x64xf32>
      %cst_97 = arith.constant dense<0.000000e+00> : vector<2x64xf32>
      %214 = tpu.matmul %198, %213, %cst_97 {dimension_numbers = #tpu.dot_dimension_numbers<[1], [0], [0], [1], [0, 0, 1, 1], [], []>} : vector<2x32xf32>, vector<32x64xf32>, vector<2x64xf32> -> vector<2x64xf32>
      %c0_98 = arith.constant 0 : index
      %c0_99 = arith.constant 0 : index
      %215 = vector.load %arg19[%c0_98, %c0_99] : memref<1x64xf32, #tpu.memory_space<vmem>>, vector<1x64xf32>
      %216 = vector.broadcast %215 : vector<1x64xf32> to vector<2x64xf32>
      %217 = arith.addf %214, %216 : vector<2x64xf32>
      %218 = arith.negf %217 : vector<2x64xf32>
      %219 = math.exp %218 : vector<2x64xf32>
      %cst_100 = arith.constant 1.000000e+00 : f32
      %220 = vector.broadcast %cst_100 : f32 to vector<2x64xf32>
      %221 = arith.addf %220, %219 : vector<2x64xf32>
      %222 = arith.divf %220, %221 : vector<2x64xf32>
      %c0_101 = arith.constant 0 : index
      %c0_102 = arith.constant 0 : index
      %223 = vector.load %arg20[%c0_101, %c0_102] : memref<1x64xf32, #tpu.memory_space<vmem>>, vector<1x64xf32>
      %224 = vector.broadcast %223 : vector<1x64xf32> to vector<2x64xf32>
      %225 = arith.mulf %222, %224 : vector<2x64xf32>
      %cst_103 = arith.constant dense<0.000000e+00> : vector<2xf32>
      %226 = vector.multi_reduction <add>, %225, %cst_103 [1] : vector<2x64xf32> to vector<2xf32>
      %227 = vector.shape_cast %226 : vector<2xf32> to vector<2x1xf32>
      %c0_104 = arith.constant 0 : index
      %c0_105 = arith.constant 0 : index
      %228 = vector.load %arg21[%c0_104, %c0_105] : memref<1x1xf32, #tpu.memory_space<vmem>>, vector<1x1xf32>
      %229 = vector.broadcast %228 : vector<1x1xf32> to vector<2x1xf32>
      %230 = arith.addf %227, %229 : vector<2x1xf32>
      %231 = arith.negf %230 : vector<2x1xf32>
      %232 = math.exp %231 : vector<2x1xf32>
      %cst_106 = arith.constant 1.000000e+00 : f32
      %233 = vector.broadcast %cst_106 : f32 to vector<2x1xf32>
      %234 = arith.addf %233, %232 : vector<2x1xf32>
      %235 = arith.divf %233, %234 : vector<2x1xf32>
      %c0_107 = arith.constant 0 : index
      %c0_108 = arith.constant 0 : index
      %236 = vector.load %arg23[%c0_107, %c0_108] : memref<2x1xf32, #tpu.memory_space<vmem>>, vector<2x1xf32>
      tpu.vector_store %arg23[%c0_107, %c0_108], %235 {strides = array<i32>} : memref<2x1xf32, #tpu.memory_space<vmem>>, vector<2x1xf32>,
    } else {
    }
    return
  }
  func.func @transform_0(%arg0: i32) -> (i32, i32) {
    %c0_i32 = arith.constant 0 : i32
    %c0_i32_0 = arith.constant 0 : i32
    %c0_i32_1 = arith.constant 0 : i32
    return %c0_i32, %c0_i32_0 : i32, i32
  }
  func.func @transform_1(%arg0: i32) -> (i32, i32, i32) {
    %c0_i32 = arith.constant 0 : i32
    %c0_i32_0 = arith.constant 0 : i32
    %c0_i32_1 = arith.constant 0 : i32
    %c0_i32_2 = arith.constant 0 : i32
    return %c0_i32, %c0_i32_0, %c0_i32_1 : i32, i32, i32
  }
  func.func @transform_2(%arg0: i32) -> (i32, i32, i32) {
    %c0_i32 = arith.constant 0 : i32
    %c0_i32_0 = arith.constant 0 : i32
    %c0_i32_1 = arith.constant 0 : i32
    return %arg0, %c0_i32, %c0_i32_0 : i32, i32, i32
  }
  func.func @transform_3(%arg0: i32) -> (i32, i32, i32) {
    %c0_i32 = arith.constant 0 : i32
    %c0_i32_0 = arith.constant 0 : i32
    %c0_i32_1 = arith.constant 0 : i32
    return %arg0, %c0_i32, %c0_i32_0 : i32, i32, i32
  }
  func.func @transform_4(%arg0: i32) -> (i32, i32, i32) {
    %c0_i32 = arith.constant 0 : i32
    %c0_i32_0 = arith.constant 0 : i32
    %c0_i32_1 = arith.constant 0 : i32
    return %arg0, %c0_i32, %c0_i32_0 : i32, i32, i32
  }
  func.func @transform_5(%arg0: i32) -> (i32, i32, i32) {
    %c0_i32 = arith.constant 0 : i32
    %c0_i32_0 = arith.constant 0 : i32
    %c0_i32_1 = arith.constant 0 : i32
    return %arg0, %c0_i32, %c0_i32_0 : i32, i32, i32
  }
  func.func @transform_6(%arg0: i32) -> (i32, i32, i32) {
    %c0_i32 = arith.constant 0 : i32
    %c0_i32_0 = arith.constant 0 : i32
    %c0_i32_1 = arith.constant 0 : i32
    return %arg0, %c0_i32, %c0_i32_0 : i32, i32, i32
  }
  func.func @transform_7(%arg0: i32) -> (i32, i32, i32) {
    %c0_i32 = arith.constant 0 : i32
    %c0_i32_0 = arith.constant 0 : i32
    %c0_i32_1 = arith.constant 0 : i32
    return %arg0, %c0_i32, %c0_i32_0 : i32, i32, i32
  }
  func.func @transform_8(%arg0: i32) -> (i32, i32, i32) {
    %c0_i32 = arith.constant 0 : i32
    %c0_i32_0 = arith.constant 0 : i32
    %c0_i32_1 = arith.constant 0 : i32
    return %arg0, %c0_i32, %c0_i32_0 : i32, i32, i32
  }
  func.func @transform_9(%arg0: i32) -> (i32, i32, i32) {
    %c0_i32 = arith.constant 0 : i32
    %c0_i32_0 = arith.constant 0 : i32
    %c0_i32_1 = arith.constant 0 : i32
    return %arg0, %c0_i32, %c0_i32_0 : i32, i32, i32
  }
  func.func @transform_10(%arg0: i32) -> (i32, i32, i32) {
    %c0_i32 = arith.constant 0 : i32
    %c0_i32_0 = arith.constant 0 : i32
    %c0_i32_1 = arith.constant 0 : i32
    return %arg0, %c0_i32, %c0_i32_0 : i32, i32, i32
  }
  func.func @transform_11(%arg0: i32) -> (i32, i32, i32) {
    %c0_i32 = arith.constant 0 : i32
    %c0_i32_0 = arith.constant 0 : i32
    %c0_i32_1 = arith.constant 0 : i32
    return %arg0, %c0_i32, %c0_i32_0 : i32, i32, i32
  }
  func.func @transform_12(%arg0: i32) -> (i32, i32, i32) {
    %c0_i32 = arith.constant 0 : i32
    %c0_i32_0 = arith.constant 0 : i32
    %c0_i32_1 = arith.constant 0 : i32
    return %arg0, %c0_i32, %c0_i32_0 : i32, i32, i32
  }
  func.func @transform_13(%arg0: i32) -> (i32, i32, i32) {
    %c0_i32 = arith.constant 0 : i32
    %c0_i32_0 = arith.constant 0 : i32
    %c0_i32_1 = arith.constant 0 : i32
    return %arg0, %c0_i32, %c0_i32_0 : i32, i32, i32
  }
  func.func @transform_14(%arg0: i32) -> (i32, i32) {
    %c0_i32 = arith.constant 0 : i32
    %c0_i32_0 = arith.constant 0 : i32
    %c0_i32_1 = arith.constant 0 : i32
    return %c0_i32, %c0_i32_0 : i32, i32
  }
  func.func @transform_15(%arg0: i32) -> (i32, i32) {
    %c0_i32 = arith.constant 0 : i32
    %c0_i32_0 = arith.constant 0 : i32
    %c0_i32_1 = arith.constant 0 : i32
    return %c0_i32, %c0_i32_0 : i32, i32
  }
  func.func @transform_16(%arg0: i32) -> (i32, i32) {
    %c0_i32 = arith.constant 0 : i32
    %c0_i32_0 = arith.constant 0 : i32
    %c0_i32_1 = arith.constant 0 : i32
    return %c0_i32, %c0_i32_0 : i32, i32
  }
  func.func @transform_17(%arg0: i32) -> (i32, i32) {
    %c0_i32 = arith.constant 0 : i32
    %c0_i32_0 = arith.constant 0 : i32
    %c0_i32_1 = arith.constant 0 : i32
    return %c0_i32, %c0_i32_0 : i32, i32
  }
  func.func @transform_18(%arg0: i32) -> (i32, i32) {
    %c0_i32 = arith.constant 0 : i32
    %c0_i32_0 = arith.constant 0 : i32
    %c0_i32_1 = arith.constant 0 : i32
    return %c0_i32, %c0_i32_0 : i32, i32
  }
  func.func @transform_19(%arg0: i32) -> (i32, i32) {
    %c0_i32 = arith.constant 0 : i32
    %c0_i32_0 = arith.constant 0 : i32
    %c0_i32_1 = arith.constant 0 : i32
    return %c0_i32, %c0_i32_0 : i32, i32
  }
  func.func @transform_20(%arg0: i32) -> (i32, i32) {
    %c0_i32 = arith.constant 0 : i32
    %c0_i32_0 = arith.constant 0 : i32
    %c0_i32_1 = arith.constant 0 : i32
    return %c0_i32, %c0_i32_0 : i32, i32
  }
  func.func @transform_21(%arg0: i32) -> (i32, i32) {
    %c0_i32 = arith.constant 0 : i32
    %c0_i32_0 = arith.constant 0 : i32
    %c0_i32_1 = arith.constant 0 : i32
    return %c0_i32, %c0_i32_0 : i32, i32
  }
  func.func @transform_22(%arg0: i32) -> (i32, i32) {
    %c0_i32 = arith.constant 0 : i32
    %c0_i32_0 = arith.constant 0 : i32
    %c0_i32_1 = arith.constant 0 : i32
    return %c0_i32, %c0_i32_0 : i32, i32
  }
}

</mosaic_0001>

<llo_original>
// kernel: bert_ite_forward.1
$region0: #{bert_ite_forward.1}
  #allocation0 [shape = 'u32[]', space=smem, size = 0x4, offset = 0x4, fixed_abs, tag = 'smem constant byte address 0x4 - core index']
  #allocation1 [shape = 'u32[72,128]{1,0:T(1,128)}', space=vmem, size = 0x9000, scoped, tag = 'internal scratch']
  #allocation2 [shape = 'f32[16,32]{1,0:T(8,128)}', space=vmem, size = 0x2000, scoped, tag = 'scratch operand']
  #allocation3 [shape = 'f32[1,1]{1,0:T(1,128)S(1)}', space=vmem, size = 0x200, scoped, tag = 'scoped memory for bert_ite_forward.1']
  #allocation4 [shape = 'f32[1,1]{1,0:T(1,128)S(1)}', space=vmem, size = 0x200, scoped, tag = 'scoped memory for bert_ite_forward.1']
  %s0 = inlined_call_operand.vmem [shape: f32[16,32], index: 0, kind: input, shape index: {}]
  %s1 = inlined_call_operand.vmem [shape: s32[2,1,8], index: 1, kind: input, shape index: {}]
  %s2 = inlined_call_operand.vmem [shape: f32[2,1,32], index: 2, kind: input, shape index: {}]
  %s3 = inlined_call_operand.vmem [shape: f32[2,1,32], index: 3, kind: input, shape index: {}]
  %s4 = inlined_call_operand.vmem [shape: f32[2,1,32], index: 4, kind: input, shape index: {}]
  %s5 = inlined_call_operand.vmem [shape: f32[2,1,32], index: 5, kind: input, shape index: {}]
  %s6 = inlined_call_operand.vmem [shape: f32[2,32,96], index: 6, kind: input, shape index: {}]
  %s7 = inlined_call_operand.vmem [shape: f32[2,1,96], index: 7, kind: input, shape index: {}]
  %s8 = inlined_call_operand.vmem [shape: f32[2,32,32], index: 8, kind: input, shape index: {}]
  %s9 = inlined_call_operand.vmem [shape: f32[2,1,32], index: 9, kind: input, shape index: {}]
  %s10 = inlined_call_operand.vmem [shape: f32[2,32,128], index: 10, kind: input, shape index: {}]
  %s11 = inlined_call_operand.vmem [shape: f32[2,1,128], index: 11, kind: input, shape index: {}]
  %s12 = inlined_call_operand.vmem [shape: f32[2,128,32], index: 12, kind: input, shape index: {}]
  %s13 = inlined_call_operand.vmem [shape: f32[2,1,32], index: 13, kind: input, shape index: {}]
  %s14 = inlined_call_operand.vmem [shape: f32[2,32], index: 14, kind: input, shape index: {}]
  %s15 = inlined_call_operand.vmem [shape: f32[1,32], index: 15, kind: input, shape index: {}]
  %s16 = inlined_call_operand.<no memory space> [shape: f32[1,1], index: 16, kind: input, shape index: {}]
  %s17 = inlined_call_operand.vmem [shape: f32[32,64], index: 17, kind: input, shape index: {}]
  %s18 = inlined_call_operand.vmem [shape: f32[1,64], index: 18, kind: input, shape index: {}]
  %s19 = inlined_call_operand.vmem [shape: f32[1,64], index: 19, kind: input, shape index: {}]
  %s20 = inlined_call_operand.<no memory space> [shape: f32[1,1], index: 20, kind: input, shape index: {}]
  %s21 = inlined_call_operand.vmem [shape: f32[2,1], index: 21, kind: output, shape index: {0}]
  %s22 = inlined_call_operand.vmem [shape: f32[2,1], index: 22, kind: output, shape index: {1}]
  %23 = xla_tuple %s21, %s22
  %s24 = sld [smem:[#allocation0]]
  $region133: #{bert_ite_forward.1} parent=0
    _
  %s26 = ssub.s32 1, %s24
  %s27 = scalar_select 0, %s26, %s24
  %v28 = vstv %s16
  %29 = vst [vmem:[#allocation3] sm:$0x1] %v28
  %v30 = vstv %s20
  %31 = vst [vmem:[#allocation4] sm:$0x1] %v30
  loop: start=0, step=1, limit=4
  $region2: #{bert_ite_forward.1} parent=0 // loop_pre_header
    _
  $region3: #{bert_ite_forward.1} parent=0 // loop_header
    %s33 = sphi 0, %s37
    %p34 = scmp.ge.s32.totalorder %s33, 4
    %s41 = sphi 0, %s41
    %s43 = sphi 0, %s41
    %s44 = sphi 0, %s43
    %s58 = sphi 0, %s44
    %s62 = sphi 0, %s62
    %s64 = sphi 0, %s62
    %s65 = sphi 0, %s64
    %s79 = sphi 0, %s65
    %s85 = sphi 0, %s87
    %s88 = sphi 0, %s85
    %s89 = sphi 0, %s88
    %s105 = sphi 0, %s89
    %s111 = sphi 0, %s113
    %s114 = sphi 0, %s111
    %s115 = sphi 0, %s114
    %s131 = sphi 0, %s115
    %s137 = sphi 0, %s139
    %s140 = sphi 0, %s137
    %s141 = sphi 0, %s140
    %s157 = sphi 0, %s141
    %s163 = sphi 0, %s165
    %s166 = sphi 0, %s163
    %s167 = sphi 0, %s166
    %s183 = sphi 0, %s167
    %s189 = sphi 0, %s191
    %s192 = sphi 0, %s189
    %s193 = sphi 0, %s192
    %s209 = sphi 0, %s193
    %s215 = sphi 0, %s217
    %s218 = sphi 0, %s215
    %s219 = sphi 0, %s218
    %s235 = sphi 0, %s219
    %s241 = sphi 0, %s243
    %s244 = sphi 0, %s241
    %s245 = sphi 0, %s244
    %s261 = sphi 0, %s245
    %s267 = sphi 0, %s269
    %s270 = sphi 0, %s267
    %s271 = sphi 0, %s270
    %s287 = sphi 0, %s271
    %s293 = sphi 0, %s295
    %s296 = sphi 0, %s293
    %s297 = sphi 0, %s296
    %s313 = sphi 0, %s297
    %s319 = sphi 0, %s321
    %s322 = sphi 0, %s319
    %s323 = sphi 0, %s322
    %s339 = sphi 0, %s323
    %s345 = sphi 0, %s347
    %s348 = sphi 0, %s345
    %s349 = sphi 0, %s348
    %s365 = sphi 0, %s349
    %s371 = sphi 0, %s373
    %s374 = sphi 0, %s371
    %s375 = sphi 0, %s374
    %s391 = sphi 0, %s375
    %s395 = sphi 0, %s395
    %s397 = sphi 0, %s395
    %s398 = sphi 0, %s397
    %s412 = sphi 0, %s398
    %s416 = sphi 0, %s416
    %s418 = sphi 0, %s416
    %s419 = sphi 0, %s418
    %s433 = sphi 0, %s419
    %s437 = sphi 0, %s437
    %s439 = sphi 0, %s437
    %s440 = sphi 0, %s439
    %s454 = sphi 0, %s440
    %s458 = sphi 0, %s458
    %s460 = sphi 0, %s458
    %s461 = sphi 0, %s460
    %s475 = sphi 0, %s461
    %s479 = sphi 0, %s479
    %s481 = sphi 0, %s479
    %s482 = sphi 0, %s481
    %s496 = sphi 0, %s482
    %s500 = sphi 0, %s500
    %s502 = sphi 0, %s500
    %s503 = sphi 0, %s502
    %s517 = sphi 0, %s503
    %s521 = sphi 0, %s521
    %s523 = sphi 0, %s521
    %s524 = sphi 0, %s523
    %s538 = sphi 0, %s524
    %s542 = sphi 0, %s542
    %s544 = sphi 0, %s542
    %s545 = sphi 0, %s544
    %s559 = sphi 0, %s545
    %s563 = sphi 0, %s563
    %s565 = sphi 0, %s563
    %s566 = sphi 0, %s565
    %s580 = sphi 0, %s566
  $region4: #{bert_ite_forward.1} parent=0 // loop_header_branch
    %36 = sbr.rel (%p34) target = $region8
  $region5: #{bert_ite_forward.1} parent=0 // loop_body
    %s38 = ssub.s32 %s33, 1
    %s39 = ssub.s32 %s33, 2
    %s40 = sadd.s32 %s33, 1
    %s42 = sadd.s32 %s41, 1
    %p45 = scmp.eq.s32.totalorder %s33, 1
    %p46 = scmp.ne.s32.totalorder %s41, %s43
    %p47 = scmp.eq.s32.totalorder %s33, 0
    %p48 = por %p46, %p47
    %p49 = scmp.ne.s32.totalorder %s41, %s43
    %p50 = scmp.eq.s32.totalorder %s38, 1
    %p51 = por %p49, %p50
    %p52 = scmp.ne.s32.totalorder %s43, %s44
    %p53 = scmp.eq.s32.totalorder %s38, 0
    %p54 = por %p52, %p53
    %p55 = scmp.ne.s32.totalorder %s43, %s44
    %p56 = scmp.eq.s32.totalorder %s39, 1
    %p57 = por %p55, %p56
    %p59 = scmp.ne.s32.totalorder %s44, %s58
    %p60 = scmp.eq.s32.totalorder %s39, 0
    %p61 = por %p59, %p60
    %s63 = sadd.s32 %s62, 1
    %p66 = scmp.eq.s32.totalorder %s33, 1
    %p67 = scmp.ne.s32.totalorder %s62, %s64
    %p68 = scmp.eq.s32.totalorder %s33, 0
    %p69 = por %p67, %p68
    %p70 = scmp.ne.s32.totalorder %s62, %s64
    %p71 = scmp.eq.s32.totalorder %s38, 1
    %p72 = por %p70, %p71
    %p73 = scmp.ne.s32.totalorder %s64, %s65
    %p74 = scmp.eq.s32.totalorder %s38, 0
    %p75 = por %p73, %p74
    %p76 = scmp.ne.s32.totalorder %s64, %s65
    %p77 = scmp.eq.s32.totalorder %s39, 1
    %p78 = por %p76, %p77
    %p80 = scmp.ne.s32.totalorder %s65, %s79
    %p81 = scmp.eq.s32.totalorder %s39, 0
    %p82 = por %p80, %p81
    %s83 = ssub.s32 %s33, %s40
    %p84 = scmp.eq.s32.totalorder %s83, 0
    %s86 = sadd.s32 %s85, 1
    %s87 = scalar_select %p84, %s85, %s86
    %p90 = pneg %p84
    %p91 = scmp.eq.s32.totalorder %s33, 1
    %p92 = por %p90, %p91
    %p93 = scmp.ne.s32.totalorder %s85, %s88
    %p94 = scmp.eq.s32.totalorder %s33, 0
    %p95 = por %p93, %p94
    %p96 = scmp.ne.s32.totalorder %s85, %s88
    %p97 = scmp.eq.s32.totalorder %s38, 1
    %p98 = por %p96, %p97
    %p99 = scmp.ne.s32.totalorder %s88, %s89
    %p100 = scmp.eq.s32.totalorder %s38, 0
    %p101 = por %p99, %p100
    %p102 = scmp.ne.s32.totalorder %s88, %s89
    %p103 = scmp.eq.s32.totalorder %s39, 1
    %p104 = por %p102, %p103
    %p106 = scmp.ne.s32.totalorder %s89, %s105
    %p107 = scmp.eq.s32.totalorder %s39, 0
    %p108 = por %p106, %p107
    %s109 = ssub.s32 %s33, %s40
    %p110 = scmp.eq.s32.totalorder %s109, 0
    %s112 = sadd.s32 %s111, 1
    %s113 = scalar_select %p110, %s111, %s112
    %p116 = pneg %p110
    %p117 = scmp.eq.s32.totalorder %s33, 1
    %p118 = por %p116, %p117
    %p119 = scmp.ne.s32.totalorder %s111, %s114
    %p120 = scmp.eq.s32.totalorder %s33, 0
    %p121 = por %p119, %p120
    %p122 = scmp.ne.s32.totalorder %s111, %s114
    %p123 = scmp.eq.s32.totalorder %s38, 1
    %p124 = por %p122, %p123
    %p125 = scmp.ne.s32.totalorder %s114, %s115
    %p126 = scmp.eq.s32.totalorder %s38, 0
    %p127 = por %p125, %p126
    %p128 = scmp.ne.s32.totalorder %s114, %s115
    %p129 = scmp.eq.s32.totalorder %s39, 1
    %p130 = por %p128, %p129
    %p132 = scmp.ne.s32.totalorder %s115, %s131
    %p133 = scmp.eq.s32.totalorder %s39, 0
    %p134 = por %p132, %p133
    %s135 = ssub.s32 %s33, %s40
    %p136 = scmp.eq.s32.totalorder %s135, 0
    %s138 = sadd.s32 %s137, 1
    %s139 = scalar_select %p136, %s137, %s138
    %p142 = pneg %p136
    %p143 = scmp.eq.s32.totalorder %s33, 1
    %p144 = por %p142, %p143
    %p145 = scmp.ne.s32.totalorder %s137, %s140
    %p146 = scmp.eq.s32.totalorder %s33, 0
    %p147 = por %p145, %p146
    %p148 = scmp.ne.s32.totalorder %s137, %s140
    %p149 = scmp.eq.s32.totalorder %s38, 1
    %p150 = por %p148, %p149
    %p151 = scmp.ne.s32.totalorder %s140, %s141
    %p152 = scmp.eq.s32.totalorder %s38, 0
    %p153 = por %p151, %p152
    %p154 = scmp.ne.s32.totalorder %s140, %s141
    %p155 = scmp.eq.s32.totalorder %s39, 1
    %p156 = por %p154, %p155
    %p158 = scmp.ne.s32.totalorder %s141, %s157
    %p159 = scmp.eq.s32.totalorder %s39, 0
    %p160 = por %p158, %p159
    %s161 = ssub.s32 %s33, %s40
    %p162 = scmp.eq.s32.totalorder %s161, 0
    %s164 = sadd.s32 %s163, 1
    %s165 = scalar_select %p162, %s163, %s164
    %p168 = pneg %p162
    %p169 = scmp.eq.s32.totalorder %s33, 1
    %p170 = por %p168, %p169
    %p171 = scmp.ne.s32.totalorder %s163, %s166
    %p172 = scmp.eq.s32.totalorder %s33, 0
    %p173 = por %p171, %p172
    %p174 = scmp.ne.s32.totalorder %s163, %s166
    %p175 = scmp.eq.s32.totalorder %s38, 1
    %p176 = por %p174, %p175
    %p177 = scmp.ne.s32.totalorder %s166, %s167
    %p178 = scmp.eq.s32.totalorder %s38, 0
    %p179 = por %p177, %p178
    %p180 = scmp.ne.s32.totalorder %s166, %s167
    %p181 = scmp.eq.s32.totalorder %s39, 1
    %p182 = por %p180, %p181
    %p184 = scmp.ne.s32.totalorder %s167, %s183
    %p185 = scmp.eq.s32.totalorder %s39, 0
    %p186 = por %p184, %p185
    %s187 = ssub.s32 %s33, %s40
    %p188 = scmp.eq.s32.totalorder %s187, 0
    %s190 = sadd.s32 %s189, 1
    %s191 = scalar_select %p188, %s189, %s190
    %p194 = pneg %p188
    %p195 = scmp.eq.s32.totalorder %s33, 1
    %p196 = por %p194, %p195
    %p197 = scmp.ne.s32.totalorder %s189, %s192
    %p198 = scmp.eq.s32.totalorder %s33, 0
    %p199 = por %p197, %p198
    %p200 = scmp.ne.s32.totalorder %s189, %s192
    %p201 = scmp.eq.s32.totalorder %s38, 1
    %p202 = por %p200, %p201
    %p203 = scmp.ne.s32.totalorder %s192, %s193
    %p204 = scmp.eq.s32.totalorder %s38, 0
    %p205 = por %p203, %p204
    %p206 = scmp.ne.s32.totalorder %s192, %s193
    %p207 = scmp.eq.s32.totalorder %s39, 1
    %p208 = por %p206, %p207
    %p210 = scmp.ne.s32.totalorder %s193, %s209
    %p211 = scmp.eq.s32.totalorder %s39, 0
    %p212 = por %p210, %p211
    %s213 = ssub.s32 %s33, %s40
    %p214 = scmp.eq.s32.totalorder %s213, 0
    %s216 = sadd.s32 %s215, 1
    %s217 = scalar_select %p214, %s215, %s216
    %p220 = pneg %p214
    %p221 = scmp.eq.s32.totalorder %s33, 1
    %p222 = por %p220, %p221
    %p223 = scmp.ne.s32.totalorder %s215, %s218
    %p224 = scmp.eq.s32.totalorder %s33, 0
    %p225 = por %p223, %p224
    %p226 = scmp.ne.s32.totalorder %s215, %s218
    %p227 = scmp.eq.s32.totalorder %s38, 1
    %p228 = por %p226, %p227
    %p229 = scmp.ne.s32.totalorder %s218, %s219
    %p230 = scmp.eq.s32.totalorder %s38, 0
    %p231 = por %p229, %p230
    %p232 = scmp.ne.s32.totalorder %s218, %s219
    %p233 = scmp.eq.s32.totalorder %s39, 1
    %p234 = por %p232, %p233
    %p236 = scmp.ne.s32.totalorder %s219, %s235
    %p237 = scmp.eq.s32.totalorder %s39, 0
    %p238 = por %p236, %p237
    %s239 = ssub.s32 %s33, %s40
    %p240 = scmp.eq.s32.totalorder %s239, 0
    %s242 = sadd.s32 %s241, 1
    %s243 = scalar_select %p240, %s241, %s242
    %p246 = pneg %p240
    %p247 = scmp.eq.s32.totalorder %s33, 1
    %p248 = por %p246, %p247
    %p249 = scmp.ne.s32.totalorder %s241, %s244
    %p250 = scmp.eq.s32.totalorder %s33, 0
    %p251 = por %p249, %p250
    %p252 = scmp.ne.s32.totalorder %s241, %s244
    %p253 = scmp.eq.s32.totalorder %s38, 1
    %p254 = por %p252, %p253
    %p255 = scmp.ne.s32.totalorder %s244, %s245
    %p256 = scmp.eq.s32.totalorder %s38, 0
    %p257 = por %p255, %p256
    %p258 = scmp.ne.s32.totalorder %s244, %s245
    %p259 = scmp.eq.s32.totalorder %s39, 1
    %p260 = por %p258, %p259
    %p262 = scmp.ne.s32.totalorder %s245, %s261
    %p263 = scmp.eq.s32.totalorder %s39, 0
    %p264 = por %p262, %p263
    %s265 = ssub.s32 %s33, %s40
    %p266 = scmp.eq.s32.totalorder %s265, 0
    %s268 = sadd.s32 %s267, 1
    %s269 = scalar_select %p266, %s267, %s268
    %p272 = pneg %p266
    %p273 = scmp.eq.s32.totalorder %s33, 1
    %p274 = por %p272, %p273
    %p275 = scmp.ne.s32.totalorder %s267, %s270
    %p276 = scmp.eq.s32.totalorder %s33, 0
    %p277 = por %p275, %p276
    %p278 = scmp.ne.s32.totalorder %s267, %s270
    %p279 = scmp.eq.s32.totalorder %s38, 1
    %p280 = por %p278, %p279
    %p281 = scmp.ne.s32.totalorder %s270, %s271
    %p282 = scmp.eq.s32.totalorder %s38, 0
    %p283 = por %p281, %p282
    %p284 = scmp.ne.s32.totalorder %s270, %s271
    %p285 = scmp.eq.s32.totalorder %s39, 1
    %p286 = por %p284, %p285
    %p288 = scmp.ne.s32.totalorder %s271, %s287
    %p289 = scmp.eq.s32.totalorder %s39, 0
    %p290 = por %p288, %p289
    %s291 = ssub.s32 %s33, %s40
    %p292 = scmp.eq.s32.totalorder %s291, 0
    %s294 = sadd.s32 %s293, 1
    %s295 = scalar_select %p292, %s293, %s294
    %p298 = pneg %p292
    %p299 = scmp.eq.s32.totalorder %s33, 1
    %p300 = por %p298, %p299
    %p301 = scmp.ne.s32.totalorder %s293, %s296
    %p302 = scmp.eq.s32.totalorder %s33, 0
    %p303 = por %p301, %p302
    %p304 = scmp.ne.s32.totalorder %s293, %s296
    %p305 = scmp.eq.s32.totalorder %s38, 1
    %p306 = por %p304, %p305
    %p307 = scmp.ne.s32.totalorder %s296, %s297
    %p308 = scmp.eq.s32.totalorder %s38, 0
    %p309 = por %p307, %p308
    %p310 = scmp.ne.s32.totalorder %s296, %s297
    %p311 = scmp.eq.s32.totalorder %s39, 1
    %p312 = por %p310, %p311
    %p314 = scmp.ne.s32.totalorder %s297, %s313
    %p315 = scmp.eq.s32.totalorder %s39, 0
    %p316 = por %p314, %p315
    %s317 = ssub.s32 %s33, %s40
    %p318 = scmp.eq.s32.totalorder %s317, 0
    %s320 = sadd.s32 %s319, 1
    %s321 = scalar_select %p318, %s319, %s320
    %p324 = pneg %p318
    %p325 = scmp.eq.s32.totalorder %s33, 1
    %p326 = por %p324, %p325
    %p327 = scmp.ne.s32.totalorder %s319, %s322
    %p328 = scmp.eq.s32.totalorder %s33, 0
    %p329 = por %p327, %p328
    %p330 = scmp.ne.s32.totalorder %s319, %s322
    %p331 = scmp.eq.s32.totalorder %s38, 1
    %p332 = por %p330, %p331
    %p333 = scmp.ne.s32.totalorder %s322, %s323
    %p334 = scmp.eq.s32.totalorder %s38, 0
    %p335 = por %p333, %p334
    %p336 = scmp.ne.s32.totalorder %s322, %s323
    %p337 = scmp.eq.s32.totalorder %s39, 1
    %p338 = por %p336, %p337
    %p340 = scmp.ne.s32.totalorder %s323, %s339
    %p341 = scmp.eq.s32.totalorder %s39, 0
    %p342 = por %p340, %p341
    %s343 = ssub.s32 %s33, %s40
    %p344 = scmp.eq.s32.totalorder %s343, 0
    %s346 = sadd.s32 %s345, 1
    %s347 = scalar_select %p344, %s345, %s346
    %p350 = pneg %p344
    %p351 = scmp.eq.s32.totalorder %s33, 1
    %p352 = por %p350, %p351
    %p353 = scmp.ne.s32.totalorder %s345, %s348
    %p354 = scmp.eq.s32.totalorder %s33, 0
    %p355 = por %p353, %p354
    %p356 = scmp.ne.s32.totalorder %s345, %s348
    %p357 = scmp.eq.s32.totalorder %s38, 1
    %p358 = por %p356, %p357
    %p359 = scmp.ne.s32.totalorder %s348, %s349
    %p360 = scmp.eq.s32.totalorder %s38, 0
    %p361 = por %p359, %p360
    %p362 = scmp.ne.s32.totalorder %s348, %s349
    %p363 = scmp.eq.s32.totalorder %s39, 1
    %p364 = por %p362, %p363
    %p366 = scmp.ne.s32.totalorder %s349, %s365
    %p367 = scmp.eq.s32.totalorder %s39, 0
    %p368 = por %p366, %p367
    %s369 = ssub.s32 %s33, %s40
    %p370 = scmp.eq.s32.totalorder %s369, 0
    %s372 = sadd.s32 %s371, 1
    %s373 = scalar_select %p370, %s371, %s372
    %p376 = pneg %p370
    %p377 = scmp.eq.s32.totalorder %s33, 1
    %p378 = por %p376, %p377
    %p379 = scmp.ne.s32.totalorder %s371, %s374
    %p380 = scmp.eq.s32.totalorder %s33, 0
    %p381 = por %p379, %p380
    %p382 = scmp.ne.s32.totalorder %s371, %s374
    %p383 = scmp.eq.s32.totalorder %s38, 1
    %p384 = por %p382, %p383
    %p385 = scmp.ne.s32.totalorder %s374, %s375
    %p386 = scmp.eq.s32.totalorder %s38, 0
    %p387 = por %p385, %p386
    %p388 = scmp.ne.s32.totalorder %s374, %s375
    %p389 = scmp.eq.s32.totalorder %s39, 1
    %p390 = por %p388, %p389
    %p392 = scmp.ne.s32.totalorder %s375, %s391
    %p393 = scmp.eq.s32.totalorder %s39, 0
    %p394 = por %p392, %p393
    %s396 = sadd.s32 %s395, 1
    %p399 = scmp.eq.s32.totalorder %s33, 1
    %p400 = scmp.ne.s32.totalorder %s395, %s397
    %p401 = scmp.eq.s32.totalorder %s33, 0
    %p402 = por %p400, %p401
    %p403 = scmp.ne.s32.totalorder %s395, %s397
    %p404 = scmp.eq.s32.totalorder %s38, 1
    %p405 = por %p403, %p404
    %p406 = scmp.ne.s32.totalorder %s397, %s398
    %p407 = scmp.eq.s32.totalorder %s38, 0
    %p408 = por %p406, %p407
    %p409 = scmp.ne.s32.totalorder %s397, %s398
    %p410 = scmp.eq.s32.totalorder %s39, 1
    %p411 = por %p409, %p410
    %p413 = scmp.ne.s32.totalorder %s398, %s412
    %p414 = scmp.eq.s32.totalorder %s39, 0
    %p415 = por %p413, %p414
    %s417 = sadd.s32 %s416, 1
    %p420 = scmp.eq.s32.totalorder %s33, 1
    %p421 = scmp.ne.s32.totalorder %s416, %s418
    %p422 = scmp.eq.s32.totalorder %s33, 0
    %p423 = por %p421, %p422
    %p424 = scmp.ne.s32.totalorder %s416, %s418
    %p425 = scmp.eq.s32.totalorder %s38, 1
    %p426 = por %p424, %p425
    %p427 = scmp.ne.s32.totalorder %s418, %s419
    %p428 = scmp.eq.s32.totalorder %s38, 0
    %p429 = por %p427, %p428
    %p430 = scmp.ne.s32.totalorder %s418, %s419
    %p431 = scmp.eq.s32.totalorder %s39, 1
    %p432 = por %p430, %p431
    %p434 = scmp.ne.s32.totalorder %s419, %s433
    %p435 = scmp.eq.s32.totalorder %s39, 0
    %p436 = por %p434, %p435
    %s438 = sadd.s32 %s437, 1
    %p441 = scmp.eq.s32.totalorder %s33, 1
    %p442 = scmp.ne.s32.totalorder %s437, %s439
    %p443 = scmp.eq.s32.totalorder %s33, 0
    %p444 = por %p442, %p443
    %p445 = scmp.ne.s32.totalorder %s437, %s439
    %p446 = scmp.eq.s32.totalorder %s38, 1
    %p447 = por %p445, %p446
    %p448 = scmp.ne.s32.totalorder %s439, %s440
    %p449 = scmp.eq.s32.totalorder %s38, 0
    %p450 = por %p448, %p449
    %p451 = scmp.ne.s32.totalorder %s439, %s440
    %p452 = scmp.eq.s32.totalorder %s39, 1
    %p453 = por %p451, %p452
    %p455 = scmp.ne.s32.totalorder %s440, %s454
    %p456 = scmp.eq.s32.totalorder %s39, 0
    %p457 = por %p455, %p456
    %s459 = sadd.s32 %s458, 1
    %p462 = scmp.eq.s32.totalorder %s33, 1
    %p463 = scmp.ne.s32.totalorder %s458, %s460
    %p464 = scmp.eq.s32.totalorder %s33, 0
    %p465 = por %p463, %p464
    %p466 = scmp.ne.s32.totalorder %s458, %s460
    %p467 = scmp.eq.s32.totalorder %s38, 1
    %p468 = por %p466, %p467
    %p469 = scmp.ne.s32.totalorder %s460, %s461
    %p470 = scmp.eq.s32.totalorder %s38, 0
    %p471 = por %p469, %p470
    %p472 = scmp.ne.s32.totalorder %s460, %s461
    %p473 = scmp.eq.s32.totalorder %s39, 1
    %p474 = por %p472, %p473
    %p476 = scmp.ne.s32.totalorder %s461, %s475
    %p477 = scmp.eq.s32.totalorder %s39, 0
    %p478 = por %p476, %p477
    %s480 = sadd.s32 %s479, 1
    %p483 = scmp.eq.s32.totalorder %s33, 1
    %p484 = scmp.ne.s32.totalorder %s479, %s481
    %p485 = scmp.eq.s32.totalorder %s33, 0
    %p486 = por %p484, %p485
    %p487 = scmp.ne.s32.totalorder %s479, %s481
    %p488 = scmp.eq.s32.totalorder %s38, 1
    %p489 = por %p487, %p488
    %p490 = scmp.ne.s32.totalorder %s481, %s482
    %p491 = scmp.eq.s32.totalorder %s38, 0
    %p492 = por %p490, %p491
    %p493 = scmp.ne.s32.totalorder %s481, %s482
    %p494 = scmp.eq.s32.totalorder %s39, 1
    %p495 = por %p493, %p494
    %p497 = scmp.ne.s32.totalorder %s482, %s496
    %p498 = scmp.eq.s32.totalorder %s39, 0
    %p499 = por %p497, %p498
    %s501 = sadd.s32 %s500, 1
    %p504 = scmp.eq.s32.totalorder %s33, 1
    %p505 = scmp.ne.s32.totalorder %s500, %s502
    %p506 = scmp.eq.s32.totalorder %s33, 0
    %p507 = por %p505, %p506
    %p508 = scmp.ne.s32.totalorder %s500, %s502
    %p509 = scmp.eq.s32.totalorder %s38, 1
    %p510 = por %p508, %p509
    %p511 = scmp.ne.s32.totalorder %s502, %s503
    %p512 = scmp.eq.s32.totalorder %s38, 0
    %p513 = por %p511, %p512
    %p514 = scmp.ne.s32.totalorder %s502, %s503
    %p515 = scmp.eq.s32.totalorder %s39, 1
    %p516 = por %p514, %p515
    %p518 = scmp.ne.s32.totalorder %s503, %s517
    %p519 = scmp.eq.s32.totalorder %s39, 0
    %p520 = por %p518, %p519
    %s522 = sadd.s32 %s521, 1
    %p525 = scmp.eq.s32.totalorder %s33, 1
    %p526 = scmp.ne.s32.totalorder %s521, %s523
    %p527 = scmp.eq.s32.totalorder %s33, 0
    %p528 = por %p526, %p527
    %p529 = scmp.ne.s32.totalorder %s521, %s523
    %p530 = scmp.eq.s32.totalorder %s38, 1
    %p531 = por %p529, %p530
    %p532 = scmp.ne.s32.totalorder %s523, %s524
    %p533 = scmp.eq.s32.totalorder %s38, 0
    %p534 = por %p532, %p533
    %p535 = scmp.ne.s32.totalorder %s523, %s524
    %p536 = scmp.eq.s32.totalorder %s39, 1
    %p537 = por %p535, %p536
    %p539 = scmp.ne.s32.totalorder %s524, %s538
    %p540 = scmp.eq.s32.totalorder %s39, 0
    %p541 = por %p539, %p540
    %s543 = sadd.s32 %s542, 1
    %p546 = scmp.eq.s32.totalorder %s33, 1
    %p547 = scmp.ne.s32.totalorder %s542, %s544
    %p548 = scmp.eq.s32.totalorder %s33, 0
    %p549 = por %p547, %p548
    %p550 = scmp.ne.s32.totalorder %s542, %s544
    %p551 = scmp.eq.s32.totalorder %s38, 1
    %p552 = por %p550, %p551
    %p553 = scmp.ne.s32.totalorder %s544, %s545
    %p554 = scmp.eq.s32.totalorder %s38, 0
    %p555 = por %p553, %p554
    %p556 = scmp.ne.s32.totalorder %s544, %s545
    %p557 = scmp.eq.s32.totalorder %s39, 1
    %p558 = por %p556, %p557
    %p560 = scmp.ne.s32.totalorder %s545, %s559
    %p561 = scmp.eq.s32.totalorder %s39, 0
    %p562 = por %p560, %p561
    %s564 = sadd.s32 %s563, 1
    %p567 = scmp.eq.s32.totalorder %s33, 1
    %p568 = scmp.ne.s32.totalorder %s563, %s565
    %p569 = scmp.eq.s32.totalorder %s33, 0
    %p570 = por %p568, %p569
    %p571 = scmp.ne.s32.totalorder %s563, %s565
    %p572 = scmp.eq.s32.totalorder %s38, 1
    %p573 = por %p571, %p572
    %p574 = scmp.ne.s32.totalorder %s565, %s566
    %p575 = scmp.eq.s32.totalorder %s38, 0
    %p576 = por %p574, %p575
    %p577 = scmp.ne.s32.totalorder %s565, %s566
    %p578 = scmp.eq.s32.totalorder %s39, 1
    %p579 = por %p577, %p578
    %p581 = scmp.ne.s32.totalorder %s566, %s580
    %p582 = scmp.eq.s32.totalorder %s39, 0
    %p583 = por %p581, %p582
    %p584 = scmp.le.s32.totalorder 1, %s33
    %p585 = scmp.lt.s32.totalorder %s33, 3
    %p586 = pnand %p584, %p585
    %p587 = pneg %p586
    // Predicated region
    $region9: #{bert_ite_forward.1} parent=5 // pred_check
      _
    $region10: #{bert_ite_forward.1} parent=5 // pred_check_branch
      %589 = sbr.rel (%p586) target = $region12
    $region11: #{bert_ite_forward.1} parent=5 // pred_region
      %s590 = ssub.s32 %s33, 1
      // Predicated region
      $region13: #{bert_ite_forward.1} parent=11 // pred_check
        %p591 = pneg %p54
      $region14: #{bert_ite_forward.1} parent=11 // pred_check_branch
        %593 = sbr.rel (%p591) target = $region16
      $region15: #{bert_ite_forward.1} parent=11 // pred_region
        _
      $region16: #{bert_ite_forward.1} parent=11 // pred_fallthru
        _
      // Predicated region
      $region17: #{bert_ite_forward.1} parent=11 // pred_check
        %p594 = pneg %p75
      $region18: #{bert_ite_forward.1} parent=11 // pred_check_branch
        %596 = sbr.rel (%p594) target = $region20
      $region19: #{bert_ite_forward.1} parent=11 // pred_region
        _
      $region20: #{bert_ite_forward.1} parent=11 // pred_fallthru
        _
      // Predicated region
      $region21: #{bert_ite_forward.1} parent=11 // pred_check
        %p597 = pneg %p408
      $region22: #{bert_ite_forward.1} parent=11 // pred_check_branch
        %599 = sbr.rel (%p597) target = $region24
      $region23: #{bert_ite_forward.1} parent=11 // pred_region
        _
      $region24: #{bert_ite_forward.1} parent=11 // pred_fallthru
        _
      // Predicated region
      $region25: #{bert_ite_forward.1} parent=11 // pred_check
        %p600 = pneg %p429
      $region26: #{bert_ite_forward.1} parent=11 // pred_check_branch
        %602 = sbr.rel (%p600) target = $region28
      $region27: #{bert_ite_forward.1} parent=11 // pred_region
        _
      $region28: #{bert_ite_forward.1} parent=11 // pred_fallthru
        _
      // Predicated region
      $region29: #{bert_ite_forward.1} parent=11 // pred_check
        %p603 = pneg %p450
      $region30: #{bert_ite_forward.1} parent=11 // pred_check_branch
        %605 = sbr.rel (%p603) target = $region32
      $region31: #{bert_ite_forward.1} parent=11 // pred_region
        _
      $region32: #{bert_ite_forward.1} parent=11 // pred_fallthru
        _
      // Predicated region
      $region33: #{bert_ite_forward.1} parent=11 // pred_check
        %p606 = pneg %p471
      $region34: #{bert_ite_forward.1} parent=11 // pred_check_branch
        %608 = sbr.rel (%p606) target = $region36
      $region35: #{bert_ite_forward.1} parent=11 // pred_region
        _
      $region36: #{bert_ite_forward.1} parent=11 // pred_fallthru
        _
      // Predicated region
      $region37: #{bert_ite_forward.1} parent=11 // pred_check
        %p609 = pneg %p492
      $region38: #{bert_ite_forward.1} parent=11 // pred_check_branch
        %611 = sbr.rel (%p609) target = $region40
      $region39: #{bert_ite_forward.1} parent=11 // pred_region
        _
      $region40: #{bert_ite_forward.1} parent=11 // pred_fallthru
        _
      // Predicated region
      $region41: #{bert_ite_forward.1} parent=11 // pred_check
        %p612 = pneg %p513
      $region42: #{bert_ite_forward.1} parent=11 // pred_check_branch
        %614 = sbr.rel (%p612) target = $region44
      $region43: #{bert_ite_forward.1} parent=11 // pred_region
        _
      $region44: #{bert_ite_forward.1} parent=11 // pred_fallthru
        _
      // Predicated region
      $region45: #{bert_ite_forward.1} parent=11 // pred_check
        %p615 = pneg %p534
      $region46: #{bert_ite_forward.1} parent=11 // pred_check_branch
        %617 = sbr.rel (%p615) target = $region48
      $region47: #{bert_ite_forward.1} parent=11 // pred_region
        _
      $region48: #{bert_ite_forward.1} parent=11 // pred_fallthru
        _
    $region12: #{bert_ite_forward.1} parent=5 // pred_fallthru
      _
    %p618 = scmp.lt.s32.totalorder %s33, 2
    // Predicated region
    $region49: #{bert_ite_forward.1} parent=5 // pred_check
      %p619 = pneg %p618
    $region50: #{bert_ite_forward.1} parent=5 // pred_check_branch
      %621 = sbr.rel (%p619) target = $region52
    $region51: #{bert_ite_forward.1} parent=5 // pred_region
      // Predicated region
      $region53: #{bert_ite_forward.1} parent=51 // pred_check
        %p622 = pneg %p95
      $region54: #{bert_ite_forward.1} parent=51 // pred_check_branch
        %624 = sbr.rel (%p622) target = $region56
      $region55: #{bert_ite_forward.1} parent=51 // pred_region
        %p625 = scmp.lt.s32.totalorder %s33, 1
        %s626 = scalar_select %p625, %s33, 1
        %s627 = scalar_lea.vmem %s2, %s626
      $region56: #{bert_ite_forward.1} parent=51 // pred_fallthru
        _
      // Predicated region
      $region57: #{bert_ite_forward.1} parent=51 // pred_check
        %p628 = pneg %p121
      $region58: #{bert_ite_forward.1} parent=51 // pred_check_branch
        %630 = sbr.rel (%p628) target = $region60
      $region59: #{bert_ite_forward.1} parent=51 // pred_region
        %p631 = scmp.lt.s32.totalorder %s33, 1
        %s632 = scalar_select %p631, %s33, 1
        %s633 = scalar_lea.vmem %s3, %s632
      $region60: #{bert_ite_forward.1} parent=51 // pred_fallthru
        _
      // Predicated region
      $region61: #{bert_ite_forward.1} parent=51 // pred_check
        %p634 = pneg %p147
      $region62: #{bert_ite_forward.1} parent=51 // pred_check_branch
        %636 = sbr.rel (%p634) target = $region64
      $region63: #{bert_ite_forward.1} parent=51 // pred_region
        %p637 = scmp.lt.s32.totalorder %s33, 1
        %s638 = scalar_select %p637, %s33, 1
        %s639 = scalar_lea.vmem %s4, %s638
      $region64: #{bert_ite_forward.1} parent=51 // pred_fallthru
        _
      // Predicated region
      $region65: #{bert_ite_forward.1} parent=51 // pred_check
        %p640 = pneg %p173
      $region66: #{bert_ite_forward.1} parent=51 // pred_check_branch
        %642 = sbr.rel (%p640) target = $region68
      $region67: #{bert_ite_forward.1} parent=51 // pred_region
        %p643 = scmp.lt.s32.totalorder %s33, 1
        %s644 = scalar_select %p643, %s33, 1
        %s645 = scalar_lea.vmem %s5, %s644
      $region68: #{bert_ite_forward.1} parent=51 // pred_fallthru
        _
      // Predicated region
      $region69: #{bert_ite_forward.1} parent=51 // pred_check
        %p646 = pneg %p199
      $region70: #{bert_ite_forward.1} parent=51 // pred_check_branch
        %648 = sbr.rel (%p646) target = $region72
      $region71: #{bert_ite_forward.1} parent=51 // pred_region
        %p649 = scmp.lt.s32.totalorder %s33, 1
        %s650 = scalar_select %p649, %s33, 1
        %s651 = smul.addr %s650, 4
        %s652 = smul.addr %s651, 8
        %s653 = scalar_lea.vmem %s6, %s652
      $region72: #{bert_ite_forward.1} parent=51 // pred_fallthru
        _
      // Predicated region
      $region73: #{bert_ite_forward.1} parent=51 // pred_check
        %p654 = pneg %p225
      $region74: #{bert_ite_forward.1} parent=51 // pred_check_branch
        %656 = sbr.rel (%p654) target = $region76
      $region75: #{bert_ite_forward.1} parent=51 // pred_region
        %p657 = scmp.lt.s32.totalorder %s33, 1
        %s658 = scalar_select %p657, %s33, 1
        %s659 = scalar_lea.vmem %s7, %s658
      $region76: #{bert_ite_forward.1} parent=51 // pred_fallthru
        _
      // Predicated region
      $region77: #{bert_ite_forward.1} parent=51 // pred_check
        %p660 = pneg %p251
      $region78: #{bert_ite_forward.1} parent=51 // pred_check_branch
        %662 = sbr.rel (%p660) target = $region80
      $region79: #{bert_ite_forward.1} parent=51 // pred_region
        %p663 = scmp.lt.s32.totalorder %s33, 1
        %s664 = scalar_select %p663, %s33, 1
        %s665 = smul.addr %s664, 4
        %s666 = smul.addr %s665, 8
        %s667 = scalar_lea.vmem %s8, %s666
      $region80: #{bert_ite_forward.1} parent=51 // pred_fallthru
        _
      // Predicated region
      $region81: #{bert_ite_forward.1} parent=51 // pred_check
        %p668 = pneg %p277
      $region82: #{bert_ite_forward.1} parent=51 // pred_check_branch
        %670 = sbr.rel (%p668) target = $region84
      $region83: #{bert_ite_forward.1} parent=51 // pred_region
        %p671 = scmp.lt.s32.totalorder %s33, 1
        %s672 = scalar_select %p671, %s33, 1
        %s673 = scalar_lea.vmem %s9, %s672
      $region84: #{bert_ite_forward.1} parent=51 // pred_fallthru
        _
      // Predicated region
      $region85: #{bert_ite_forward.1} parent=51 // pred_check
        %p674 = pneg %p303
      $region86: #{bert_ite_forward.1} parent=51 // pred_check_branch
        %676 = sbr.rel (%p674) target = $region88
      $region87: #{bert_ite_forward.1} parent=51 // pred_region
        %p677 = scmp.lt.s32.totalorder %s33, 1
        %s678 = scalar_select %p677, %s33, 1
        %s679 = smul.addr %s678, 4
        %s680 = smul.addr %s679, 8
        %s681 = scalar_lea.vmem %s10, %s680
      $region88: #{bert_ite_forward.1} parent=51 // pred_fallthru
        _
      // Predicated region
      $region89: #{bert_ite_forward.1} parent=51 // pred_check
        %p682 = pneg %p329
      $region90: #{bert_ite_forward.1} parent=51 // pred_check_branch
        %684 = sbr.rel (%p682) target = $region92
      $region91: #{bert_ite_forward.1} parent=51 // pred_region
        %p685 = scmp.lt.s32.totalorder %s33, 1
        %s686 = scalar_select %p685, %s33, 1
        %s687 = scalar_lea.vmem %s11, %s686
      $region92: #{bert_ite_forward.1} parent=51 // pred_fallthru
        _
      // Predicated region
      $region93: #{bert_ite_forward.1} parent=51 // pred_check
        %p688 = pneg %p355
      $region94: #{bert_ite_forward.1} parent=51 // pred_check_branch
        %690 = sbr.rel (%p688) target = $region96
      $region95: #{bert_ite_forward.1} parent=51 // pred_region
        %p691 = scmp.lt.s32.totalorder %s33, 1
        %s692 = scalar_select %p691, %s33, 1
        %s693 = smul.addr %s692, 16
        %s694 = smul.addr %s693, 8
        %s695 = scalar_lea.vmem %s12, %s694
      $region96: #{bert_ite_forward.1} parent=51 // pred_fallthru
        _
      // Predicated region
      $region97: #{bert_ite_forward.1} parent=51 // pred_check
        %p696 = pneg %p381
      $region98: #{bert_ite_forward.1} parent=51 // pred_check_branch
        %698 = sbr.rel (%p696) target = $region100
      $region99: #{bert_ite_forward.1} parent=51 // pred_region
        %p699 = scmp.lt.s32.totalorder %s33, 1
        %s700 = scalar_select %p699, %s33, 1
        %s701 = scalar_lea.vmem %s13, %s700
      $region100: #{bert_ite_forward.1} parent=51 // pred_fallthru
        _
    $region52: #{bert_ite_forward.1} parent=5 // pred_fallthru
      _
    %p702 = scmp.le.s32.totalorder 1, %s33
    %p703 = scmp.lt.s32.totalorder %s33, 3
    %p704 = pnand %p702, %p703
    %p705 = pneg %p704
    // Predicated region
    $region101: #{bert_ite_forward.1} parent=5 // pred_check
      _
    $region102: #{bert_ite_forward.1} parent=5 // pred_check_branch
      %707 = sbr.rel (%p704) target = $region104
    $region103: #{bert_ite_forward.1} parent=5 // pred_region
      %s708 = ssub.s32 %s33, 1
      %p709 = pneg %p54
      %p710 = pneg %p51
      %p711 = pneg %p75
      %p712 = pneg %p72
      %p713 = scmp.lt.s32.totalorder %s38, 1
      %s714 = scalar_select %p713, %s38, 1
      %s715 = scalar_lea.vmem %s2, %s714
      %p716 = pneg %p101
      %p717 = pneg %p98
      %p718 = scmp.lt.s32.totalorder %s38, 1
      %s719 = scalar_select %p718, %s38, 1
      %s720 = scalar_lea.vmem %s3, %s719
      %p721 = pneg %p127
      %p722 = pneg %p124
      %p723 = scmp.lt.s32.totalorder %s38, 1
      %s724 = scalar_select %p723, %s38, 1
      %s725 = scalar_lea.vmem %s4, %s724
      %p726 = pneg %p153
      %p727 = pneg %p150
      %p728 = scmp.lt.s32.totalorder %s38, 1
      %s729 = scalar_select %p728, %s38, 1
      %s730 = scalar_lea.vmem %s5, %s729
      %p731 = pneg %p179
      %p732 = pneg %p176
      %p733 = scmp.lt.s32.totalorder %s38, 1
      %s734 = scalar_select %p733, %s38, 1
      %s735 = smul.addr %s734, 4
      %s736 = smul.addr %s735, 8
      %s737 = scalar_lea.vmem %s6, %s736
      %p738 = pneg %p205
      %p739 = pneg %p202
      %p740 = scmp.lt.s32.totalorder %s38, 1
      %s741 = scalar_select %p740, %s38, 1
      %s742 = scalar_lea.vmem %s7, %s741
      %p743 = pneg %p231
      %p744 = pneg %p228
      %p745 = scmp.lt.s32.totalorder %s38, 1
      %s746 = scalar_select %p745, %s38, 1
      %s747 = smul.addr %s746, 4
      %s748 = smul.addr %s747, 8
      %s749 = scalar_lea.vmem %s8, %s748
      %p750 = pneg %p257
      %p751 = pneg %p254
      %p752 = scmp.lt.s32.totalorder %s38, 1
      %s753 = scalar_select %p752, %s38, 1
      %s754 = scalar_lea.vmem %s9, %s753
      %p755 = pneg %p283
      %p756 = pneg %p280
      %p757 = scmp.lt.s32.totalorder %s38, 1
      %s758 = scalar_select %p757, %s38, 1
      %s759 = smul.addr %s758, 4
      %s760 = smul.addr %s759, 8
      %s761 = scalar_lea.vmem %s10, %s760
      %p762 = pneg %p309
      %p763 = pneg %p306
      %p764 = scmp.lt.s32.totalorder %s38, 1
      %s765 = scalar_select %p764, %s38, 1
      %s766 = scalar_lea.vmem %s11, %s765
      %p767 = pneg %p335
      %p768 = pneg %p332
      %p769 = scmp.lt.s32.totalorder %s38, 1
      %s770 = scalar_select %p769, %s38, 1
      %s771 = smul.addr %s770, 16
      %s772 = smul.addr %s771, 8
      %s773 = scalar_lea.vmem %s12, %s772
      %p774 = pneg %p361
      %p775 = pneg %p358
      %p776 = scmp.lt.s32.totalorder %s38, 1
      %s777 = scalar_select %p776, %s38, 1
      %s778 = scalar_lea.vmem %s13, %s777
      %p779 = pneg %p387
      %p780 = pneg %p384
      %p781 = pneg %p408
      %p782 = pneg %p405
      %p783 = pneg %p429
      %p784 = pneg %p426
      %p785 = pneg %p450
      %p786 = pneg %p447
      %p787 = pneg %p471
      %p788 = pneg %p468
      %p789 = pneg %p492
      %p790 = pneg %p489
      %p791 = pneg %p513
      %p792 = pneg %p510
      %p793 = pneg %p534
      %p794 = pneg %p531
      %p795 = pneg %p555
      %p796 = pneg %p552
      %p797 = pneg %p576
      %p798 = pneg %p573
      %p799 = scmp.lt.s32.totalorder %s38, 1
      %s800 = scalar_select %p799, %s38, 1
      %s801 = scalar_lea.vmem %s2, %s800
      %p802 = scmp.lt.s32.totalorder %s38, 1
      %s803 = scalar_select %p802, %s38, 1
      %s804 = scalar_lea.vmem %s3, %s803
      %p805 = scmp.lt.s32.totalorder %s38, 1
      %s806 = scalar_select %p805, %s38, 1
      %s807 = scalar_lea.vmem %s4, %s806
      %p808 = scmp.lt.s32.totalorder %s38, 1
      %s809 = scalar_select %p808, %s38, 1
      %s810 = scalar_lea.vmem %s5, %s809
      %p811 = scmp.lt.s32.totalorder %s38, 1
      %s812 = scalar_select %p811, %s38, 1
      %s813 = smul.addr %s812, 4
      %s814 = smul.addr %s813, 8
      %s815 = scalar_lea.vmem %s6, %s814
      %p816 = scmp.lt.s32.totalorder %s38, 1
      %s817 = scalar_select %p816, %s38, 1
      %s818 = scalar_lea.vmem %s7, %s817
      %p819 = scmp.lt.s32.totalorder %s38, 1
      %s820 = scalar_select %p819, %s38, 1
      %s821 = smul.addr %s820, 4
      %s822 = smul.addr %s821, 8
      %s823 = scalar_lea.vmem %s8, %s822
      %p824 = scmp.lt.s32.totalorder %s38, 1
      %s825 = scalar_select %p824, %s38, 1
      %s826 = scalar_lea.vmem %s9, %s825
      %p827 = scmp.lt.s32.totalorder %s38, 1
      %s828 = scalar_select %p827, %s38, 1
      %s829 = smul.addr %s828, 4
      %s830 = smul.addr %s829, 8
      %s831 = scalar_lea.vmem %s10, %s830
      %p832 = scmp.lt.s32.totalorder %s38, 1
      %s833 = scalar_select %p832, %s38, 1
      %s834 = scalar_lea.vmem %s11, %s833
      %p835 = scmp.lt.s32.totalorder %s38, 1
      %s836 = scalar_select %p835, %s38, 1
      %s837 = smul.addr %s836, 16
      %s838 = smul.addr %s837, 8
      %s839 = scalar_lea.vmem %s12, %s838
      %p840 = scmp.lt.s32.totalorder %s38, 1
      %s841 = scalar_select %p840, %s38, 1
      %s842 = scalar_lea.vmem %s13, %s841
      %p843 = scmp.eq.s32.totalorder %s38, 0
      // Predicated region
      $region105: #{bert_ite_forward.1} parent=103 // pred_check
        %p844 = pneg %p843
      $region106: #{bert_ite_forward.1} parent=103 // pred_check_branch
        %846 = sbr.rel (%p844) target = $region108
      $region107: #{bert_ite_forward.1} parent=103 // pred_region
        %v847 = vld [vmem:[%s0] sm:$0xff]
        %v848 = vld [vmem:[%s0 + $0x8] sm:$0xff]
        %vm849 = vcmask 261120
        %850 = vst.msk [vmem:[#allocation2] sm:$0xff] %vm849, %v847
        %851 = vst.msk [vmem:[#allocation2 + $0x8] sm:$0xff] %vm849, %v848
      $region108: #{bert_ite_forward.1} parent=103 // pred_fallthru
        _
      %v852 = vld [vmem:[#allocation2] sm:$0xff]
      %v853 = vld [vmem:[#allocation2 + $0x8] sm:$0xff]
      %v854 = vld [vmem:[%s801] sm:$0x1]
      %v855 = vld [vmem:[%s804] sm:$0x1]
      %vm856 = vcmask 261120
      %v857 = vsel %vm856, %v852, 0.0
      %858 = vadd.xlane.f32.xlu0 %v857
      %v859 = vpop.xlane.xlu0 %858
      %v860 = vsel %vm856, %v853, 0.0
      %861 = vadd.xlane.f32.xlu0 %v860
      %v862 = vpop.xlane.xlu0 %861
      %v863 = vrcp.pop 32.0
      %v864 = vmul.f32 32.0, %v863
      %v865 = vsub.f32 1.0, %v864
      %v866 = vmul.f32 %v863, %v865
      %v867 = vadd.f32 %v863, %v866
      %vm868 = vweird.f32 %v863
      %v869 = vsel %vm868, %v863, %v867
      %v870 = vmul.f32 %v859, %v869
      %v871 = vmul.f32 %v862, %v869
      %v872 = vsub.f32 %v852, %v870
      %v873 = vsub.f32 %v853, %v871
      %v874 = vmul.f32 %v872, %v872
      %v875 = vmul.f32 %v873, %v873
      %v876 = vsel %vm856, %v874, 0.0
      %877 = vadd.xlane.f32.xlu0 %v876
      %v878 = vpop.xlane.xlu0 %877
      %v879 = vsel %vm856, %v875, 0.0
      %880 = vadd.xlane.f32.xlu0 %v879
      %v881 = vpop.xlane.xlu0 %880
      %v882 = vmul.f32 %v878, %v869
      %v883 = vmul.f32 %v881, %v869
      %v884 = vadd.f32 %v882, 1e-05
      %v885 = vadd.f32 %v883, 1e-05
      %v886 = vrsqrt.pop %v884
      %v887 = vmul.f32 %v886, %v884
      %v888 = vmul.f32 %v887, %v886
      %v889 = vmul.f32 0.5, %v888
      %v890 = vsub.f32 1.5, %v889
      %v891 = vmul.f32 %v886, %v890
      %vm892 = vweird.f32 %v884
      %vm893 = vweird.f32 %v886
      %vm894 = vmor %vm892, %vm893
      %v895 = vsel %vm894, %v886, %v891
      %v896 = vrsqrt.pop %v885
      %v897 = vmul.f32 %v896, %v885
      %v898 = vmul.f32 %v897, %v896
      %v899 = vmul.f32 0.5, %v898
      %v900 = vsub.f32 1.5, %v899
      %v901 = vmul.f32 %v896, %v900
      %vm902 = vweird.f32 %v885
      %vm903 = vweird.f32 %v896
      %vm904 = vmor %vm902, %vm903
      %v905 = vsel %vm904, %v896, %v901
      %v906 = vmul.f32 %v872, %v895
      %v907 = vmul.f32 %v873, %v905
      %v909 = vperm.slane %v854, 0
      %v911 = vmul.f32 %v906, %v909
      %v912 = vmul.f32 %v907, %v909
      %v914 = vperm.slane %v855, 0
      %v916 = vadd.f32 %v911, %v914
      %v917 = vadd.f32 %v912, %v914
      %v918 = vld [vmem:[%s815] sm:$0xff]
      %v919 = vld [vmem:[%s815 + $0x8] sm:$0xff]
      %v920 = vld [vmem:[%s815 + $0x10] sm:$0xff]
      %v921 = vld [vmem:[%s815 + $0x18] sm:$0xff]
      %v922 = vld [vmem:[%s818] sm:$0x1]
      %v924 = vperm.slane %v922, 0
      %v927 = vsel %vm856, %v916, 0
      %v930 = vsel %vm856, %v917, 0
      %932 = vmatpush.msra.mxu0 0.0
      %933 = vmatpush.msra.mxu0 0.0
      %934 = vmatpush.msra.mxu0 0.0
      %935 = vmatpush.msra.mxu0 0.0
      %936 = vmatpush.msra.mxu0 0.0
      %937 = vmatpush.msra.mxu0 0.0
      %938 = vmatpush.msra.mxu0 0.0
      %939 = vmatpush.msra.mxu0 0.0
      %940 = vmatpush.msra.mxu0 0.0
      %941 = vmatpush.msra.mxu0 0.0
      %942 = vmatpush.msra.mxu0 0.0
      %943 = vmatpush.msra.mxu0 0.0
      %944 = vmatpush.msra.mxu0 %v921
      %945 = vmatpush.msra.mxu0 %v920
      %946 = vmatpush.msra.mxu0 %v919
      %947 = vmatpush.msra.mxu0 %v918
      %948 = vmatmul.f32.gmra.mxu0 %v927
      %v949 = vpop.f32.mrf.mxu0
      %v950 = vadd.f32 %v924, %v949
      %951 = vmatmul.f32.gmra.mxu0 %v930
      %v952 = vpop.f32.mrf.mxu0
      %v953 = vadd.f32 %v924, %v952
      %954 = vdwg.mxu0
      %v955 = vld [vmem:[%s1] sm:$0x1]
      %v956 = vld [vmem:[%s1 + $0x1] sm:$0x1]
      %vm957 = vcmp.eq.s32.totalorder %v955, 0
      %vm958 = vcmp.eq.s32.totalorder %v956, 0
      %v959 = vld [vmem:[%s823] sm:$0xff]
      %v960 = vld [vmem:[%s823 + $0x8] sm:$0xff]
      %v961 = vld [vmem:[%s823 + $0x10] sm:$0xff]
      %v962 = vld [vmem:[%s823 + $0x18] sm:$0xff]
      %964 = vrot.lane.b32.xlu0 %v950, 96
      %v965 = vpop.permute.xlu0 %964
      %vm966 = vcmask 64512
      %v967 = vsel %vm966, %v950, 0
      %v969 = vsel %vm966, %v965, 0
      %971 = vmatpush.xpose.msra.mxu0 0.0
      %972 = vmatpush.xpose.msra.mxu0 0.0
      %973 = vmatpush.xpose.msra.mxu0 0.0
      %974 = vmatpush.xpose.msra.mxu0 0.0
      %975 = vmatpush.xpose.msra.mxu0 0.0
      %976 = vmatpush.xpose.msra.mxu0 0.0
      %977 = vmatpush.xpose.msra.mxu0 0.0
      %978 = vmatpush.xpose.msra.mxu0 0.0
      %979 = vmatpush.xpose.msra.mxu0 0.0
      %980 = vmatpush.xpose.msra.mxu0 0.0
      %981 = vmatpush.xpose.msra.mxu0 0.0
      %982 = vmatpush.xpose.msra.mxu0 0.0
      %983 = vmatpush.xpose.msra.mxu0 0.0
      %984 = vmatpush.xpose.msra.mxu0 0.0
      %985 = vmatpush.xpose.msra.mxu0 0.0
      %986 = vmatpush.xpose.msra.mxu0 %v969
      %987 = vmatmul.f32.gmra.mxu0 %v967
      %v988 = vpop.f32.mrf.mxu0
      %v989 = vadd.f32 0.0, %v988
      %990 = vdwg.mxu0
      %992 = vrot.lane.b32.xlu0 %v953, 96
      %v993 = vpop.permute.xlu0 %992
      %v994 = vsel %vm966, %v953, 0
      %v996 = vsel %vm966, %v993, 0
      %998 = vmatpush.xpose.msra.mxu0 0.0
      %999 = vmatpush.xpose.msra.mxu0 0.0
      %1000 = vmatpush.xpose.msra.mxu0 0.0
      %1001 = vmatpush.xpose.msra.mxu0 0.0
      %1002 = vmatpush.xpose.msra.mxu0 0.0
      %1003 = vmatpush.xpose.msra.mxu0 0.0
      %1004 = vmatpush.xpose.msra.mxu0 0.0
      %1005 = vmatpush.xpose.msra.mxu0 0.0
      %1006 = vmatpush.xpose.msra.mxu0 0.0
      %1007 = vmatpush.xpose.msra.mxu0 0.0
      %1008 = vmatpush.xpose.msra.mxu0 0.0
      %1009 = vmatpush.xpose.msra.mxu0 0.0
      %1010 = vmatpush.xpose.msra.mxu0 0.0
      %1011 = vmatpush.xpose.msra.mxu0 0.0
      %1012 = vmatpush.xpose.msra.mxu0 0.0
      %1013 = vmatpush.xpose.msra.mxu0 %v996
      %1014 = vmatmul.f32.gmra.mxu0 %v994
      %v1015 = vpop.f32.mrf.mxu0
      %v1016 = vadd.f32 0.0, %v1015
      %1017 = vdwg.mxu0
      %v1018 = vsel %vm957, 1, 0
      %v1019 = vsel %vm958, 1, 0
      %v1020 = vperm.slane %v1018, 0
      %v1021 = vperm.slane %v1019, 0
      %vm1022 = vcmp.eq.s32.totalorder %v1020, 1
      %vm1023 = vcmp.eq.s32.totalorder %v1021, 1
      %v1024 = vsel %vm1022, -1e+30, %v989
      %v1025 = vsel %vm1023, -1e+30, %v1016
      %v1026 = vsel %vm966, %v1024, -inf
      %1027 = vmax.xlane.f32.xlu0 %v1026
      %v1028 = vpop.xlane.xlu0 %1027
      %v1029 = vsel %vm966, %v1025, -inf
      %1030 = vmax.xlane.f32.xlu0 %v1029
      %v1031 = vpop.xlane.xlu0 %1030
      %v1032 = vsub.f32 %v1024, %v1028
      %v1033 = vsub.f32 %v1025, %v1031
      %v1034 = vmul.f32 %v1032, 1.442695
      %v1035 = vpow.pop %v1034
      %v1036 = vmul.f32 %v1033, 1.442695
      %v1037 = vpow.pop %v1036
      %v1038 = vsel %vm966, %v1035, 0.0
      %1039 = vadd.xlane.f32.xlu0 %v1038
      %v1040 = vpop.xlane.xlu0 %1039
      %v1041 = vsel %vm966, %v1037, 0.0
      %1042 = vadd.xlane.f32.xlu0 %v1041
      %v1043 = vpop.xlane.xlu0 %1042
      %v1044 = vrcp.pop %v1040
      %v1045 = vrcp.pop %v1043
      %v1046 = vmul.f32 %v1035, %v1044
      %v1047 = vmul.f32 %v1037, %v1045
      %1048 = vrot.lane.b32.xlu0 %v950, 64
      %v1049 = vpop.permute.xlu0 %1048
      %v1052 = vsel %vm966, %v1046, 0
      %1054 = vmatpush.msra.mxu0 0.0
      %1055 = vmatpush.msra.mxu0 0.0
      %1056 = vmatpush.msra.mxu0 0.0
      %1057 = vmatpush.msra.mxu0 0.0
      %1058 = vmatpush.msra.mxu0 0.0
      %1059 = vmatpush.msra.mxu0 0.0
      %1060 = vmatpush.msra.mxu0 0.0
      %1061 = vmatpush.msra.mxu0 0.0
      %1062 = vmatpush.msra.mxu0 0.0
      %1063 = vmatpush.msra.mxu0 0.0
      %1064 = vmatpush.msra.mxu0 0.0
      %1065 = vmatpush.msra.mxu0 0.0
      %1066 = vmatpush.msra.mxu0 0.0
      %1067 = vmatpush.msra.mxu0 0.0
      %1068 = vmatpush.msra.mxu0 0.0
      %1069 = vmatpush.msra.mxu0 %v1049
      %1070 = vmatmul.f32.gmra.mxu0 %v1052
      %v1071 = vpop.f32.mrf.mxu0
      %v1072 = vadd.f32 0.0, %v1071
      %1073 = vdwg.mxu0
      %1074 = vrot.lane.b32.xlu0 %v953, 64
      %v1075 = vpop.permute.xlu0 %1074
      %v1078 = vsel %vm966, %v1047, 0
      %1080 = vmatpush.msra.mxu0 0.0
      %1081 = vmatpush.msra.mxu0 0.0
      %1082 = vmatpush.msra.mxu0 0.0
      %1083 = vmatpush.msra.mxu0 0.0
      %1084 = vmatpush.msra.mxu0 0.0
      %1085 = vmatpush.msra.mxu0 0.0
      %1086 = vmatpush.msra.mxu0 0.0
      %1087 = vmatpush.msra.mxu0 0.0
      %1088 = vmatpush.msra.mxu0 0.0
      %1089 = vmatpush.msra.mxu0 0.0
      %1090 = vmatpush.msra.mxu0 0.0
      %1091 = vmatpush.msra.mxu0 0.0
      %1092 = vmatpush.msra.mxu0 0.0
      %1093 = vmatpush.msra.mxu0 0.0
      %1094 = vmatpush.msra.mxu0 0.0
      %1095 = vmatpush.msra.mxu0 %v1075
      %1096 = vmatmul.f32.gmra.mxu0 %v1078
      %v1097 = vpop.f32.mrf.mxu0
      %v1098 = vadd.f32 0.0, %v1097
      %1099 = vdwg.mxu0
      %1100 = vrot.lane.b32.xlu0 %v950, 120
      %v1101 = vpop.permute.xlu0 %1100
      %1102 = vrot.lane.b32.xlu0 %v950, 88
      %v1103 = vpop.permute.xlu0 %1102
      %v1104 = vsel %vm966, %v1101, 0
      %v1106 = vsel %vm966, %v1103, 0
      %1108 = vmatpush.xpose.msra.mxu0 0.0
      %1109 = vmatpush.xpose.msra.mxu0 0.0
      %1110 = vmatpush.xpose.msra.mxu0 0.0
      %1111 = vmatpush.xpose.msra.mxu0 0.0
      %1112 = vmatpush.xpose.msra.mxu0 0.0
      %1113 = vmatpush.xpose.msra.mxu0 0.0
      %1114 = vmatpush.xpose.msra.mxu0 0.0
      %1115 = vmatpush.xpose.msra.mxu0 0.0
      %1116 = vmatpush.xpose.msra.mxu0 0.0
      %1117 = vmatpush.xpose.msra.mxu0 0.0
      %1118 = vmatpush.xpose.msra.mxu0 0.0
      %1119 = vmatpush.xpose.msra.mxu0 0.0
      %1120 = vmatpush.xpose.msra.mxu0 0.0
      %1121 = vmatpush.xpose.msra.mxu0 0.0
      %1122 = vmatpush.xpose.msra.mxu0 0.0
      %1123 = vmatpush.xpose.msra.mxu0 %v1106
      %1124 = vmatmul.f32.gmra.mxu0 %v1104
      %v1125 = vpop.f32.mrf.mxu0
      %v1126 = vadd.f32 0.0, %v1125
      %1127 = vdwg.mxu0
      %1128 = vrot.lane.b32.xlu0 %v953, 120
      %v1129 = vpop.permute.xlu0 %1128
      %1130 = vrot.lane.b32.xlu0 %v953, 88
      %v1131 = vpop.permute.xlu0 %1130
      %v1132 = vsel %vm966, %v1129, 0
      %v1134 = vsel %vm966, %v1131, 0
      %1136 = vmatpush.xpose.msra.mxu0 0.0
      %1137 = vmatpush.xpose.msra.mxu0 0.0
      %1138 = vmatpush.xpose.msra.mxu0 0.0
      %1139 = vmatpush.xpose.msra.mxu0 0.0
      %1140 = vmatpush.xpose.msra.mxu0 0.0
      %1141 = vmatpush.xpose.msra.mxu0 0.0
      %1142 = vmatpush.xpose.msra.mxu0 0.0
      %1143 = vmatpush.xpose.msra.mxu0 0.0
      %1144 = vmatpush.xpose.msra.mxu0 0.0
      %1145 = vmatpush.xpose.msra.mxu0 0.0
      %1146 = vmatpush.xpose.msra.mxu0 0.0
      %1147 = vmatpush.xpose.msra.mxu0 0.0
      %1148 = vmatpush.xpose.msra.mxu0 0.0
      %1149 = vmatpush.xpose.msra.mxu0 0.0
      %1150 = vmatpush.xpose.msra.mxu0 0.0
      %1151 = vmatpush.xpose.msra.mxu0 %v1134
      %1152 = vmatmul.f32.gmra.mxu0 %v1132
      %v1153 = vpop.f32.mrf.mxu0
      %v1154 = vadd.f32 0.0, %v1153
      %1155 = vdwg.mxu0
      %v1156 = vsel %vm1022, -1e+30, %v1126
      %v1157 = vsel %vm1023, -1e+30, %v1154
      %v1158 = vsel %vm966, %v1156, -inf
      %1159 = vmax.xlane.f32.xlu0 %v1158
      %v1160 = vpop.xlane.xlu0 %1159
      %v1161 = vsel %vm966, %v1157, -inf
      %1162 = vmax.xlane.f32.xlu0 %v1161
      %v1163 = vpop.xlane.xlu0 %1162
      %v1164 = vsub.f32 %v1156, %v1160
      %v1165 = vsub.f32 %v1157, %v1163
      %v1166 = vmul.f32 %v1164, 1.442695
      %v1167 = vpow.pop %v1166
      %v1168 = vmul.f32 %v1165, 1.442695
      %v1169 = vpow.pop %v1168
      %v1170 = vsel %vm966, %v1167, 0.0
      %1171 = vadd.xlane.f32.xlu0 %v1170
      %v1172 = vpop.xlane.xlu0 %1171
      %v1173 = vsel %vm966, %v1169, 0.0
      %1174 = vadd.xlane.f32.xlu0 %v1173
      %v1175 = vpop.xlane.xlu0 %1174
      %v1176 = vrcp.pop %v1172
      %v1177 = vrcp.pop %v1175
      %v1178 = vmul.f32 %v1167, %v1176
      %v1179 = vmul.f32 %v1169, %v1177
      %1180 = vrot.lane.b32.xlu0 %v950, 56
      %v1181 = vpop.permute.xlu0 %1180
      %v1184 = vsel %vm966, %v1178, 0
      %1186 = vmatpush.msra.mxu0 0.0
      %1187 = vmatpush.msra.mxu0 0.0
      %1188 = vmatpush.msra.mxu0 0.0
      %1189 = vmatpush.msra.mxu0 0.0
      %1190 = vmatpush.msra.mxu0 0.0
      %1191 = vmatpush.msra.mxu0 0.0
      %1192 = vmatpush.msra.mxu0 0.0
      %1193 = vmatpush.msra.mxu0 0.0
      %1194 = vmatpush.msra.mxu0 0.0
      %1195 = vmatpush.msra.mxu0 0.0
      %1196 = vmatpush.msra.mxu0 0.0
      %1197 = vmatpush.msra.mxu0 0.0
      %1198 = vmatpush.msra.mxu0 0.0
      %1199 = vmatpush.msra.mxu0 0.0
      %1200 = vmatpush.msra.mxu0 0.0
      %1201 = vmatpush.msra.mxu0 %v1181
      %1202 = vmatmul.f32.gmra.mxu0 %v1184
      %v1203 = vpop.f32.mrf.mxu0
      %v1204 = vadd.f32 0.0, %v1203
      %1205 = vdwg.mxu0
      %1206 = vrot.lane.b32.xlu0 %v953, 56
      %v1207 = vpop.permute.xlu0 %1206
      %v1210 = vsel %vm966, %v1179, 0
      %1212 = vmatpush.msra.mxu0 0.0
      %1213 = vmatpush.msra.mxu0 0.0
      %1214 = vmatpush.msra.mxu0 0.0
      %1215 = vmatpush.msra.mxu0 0.0
      %1216 = vmatpush.msra.mxu0 0.0
      %1217 = vmatpush.msra.mxu0 0.0
      %1218 = vmatpush.msra.mxu0 0.0
      %1219 = vmatpush.msra.mxu0 0.0
      %1220 = vmatpush.msra.mxu0 0.0
      %1221 = vmatpush.msra.mxu0 0.0
      %1222 = vmatpush.msra.mxu0 0.0
      %1223 = vmatpush.msra.mxu0 0.0
      %1224 = vmatpush.msra.mxu0 0.0
      %1225 = vmatpush.msra.mxu0 0.0
      %1226 = vmatpush.msra.mxu0 0.0
      %1227 = vmatpush.msra.mxu0 %v1207
      %1228 = vmatmul.f32.gmra.mxu0 %v1210
      %v1229 = vpop.f32.mrf.mxu0
      %v1230 = vadd.f32 0.0, %v1229
      %1231 = vdwg.mxu0
      %v1233 = vsel %vm966, %v1204, 0
      %v1236 = vsel %vm966, %v1230, 0
      %1238 = vmatpush.msra.mxu0 0.0
      %1239 = vmatpush.msra.mxu0 0.0
      %1240 = vmatpush.msra.mxu0 0.0
      %1241 = vmatpush.msra.mxu0 0.0
      %1242 = vmatpush.msra.mxu0 0.0
      %1243 = vmatpush.msra.mxu0 0.0
      %1244 = vmatpush.msra.mxu0 0.0
      %1245 = vmatpush.msra.mxu0 0.0
      %1246 = vmatpush.msra.mxu0 0.0
      %1247 = vmatpush.msra.mxu0 0.0
      %1248 = vmatpush.msra.mxu0 0.0
      %1249 = vmatpush.msra.mxu0 0.0
      %1250 = vmatpush.msra.mxu0 0.0
      %1251 = vmatpush.msra.mxu0 0.0
      %1252 = vmatpush.msra.mxu0 0.0
      %1253 = vmatpush.msra.mxu0 %v960
      %1254 = vmatmul.f32.gmra.mxu0 %v1233
      %v1255 = vpop.f32.mrf.mxu0
      %v1256 = vadd.f32 0.0, %v1255
      %1257 = vmatmul.f32.gmra.mxu0 %v1236
      %v1258 = vpop.f32.mrf.mxu0
      %v1259 = vadd.f32 0.0, %v1258
      %1260 = vdwg.mxu0
      %v1262 = vsel %vm966, %v1072, 0
      %v1265 = vsel %vm966, %v1098, 0
      %1267 = vmatpush.msra.mxu0 0.0
      %1268 = vmatpush.msra.mxu0 0.0
      %1269 = vmatpush.msra.mxu0 0.0
      %1270 = vmatpush.msra.mxu0 0.0
      %1271 = vmatpush.msra.mxu0 0.0
      %1272 = vmatpush.msra.mxu0 0.0
      %1273 = vmatpush.msra.mxu0 0.0
      %1274 = vmatpush.msra.mxu0 0.0
      %1275 = vmatpush.msra.mxu0 0.0
      %1276 = vmatpush.msra.mxu0 0.0
      %1277 = vmatpush.msra.mxu0 0.0
      %1278 = vmatpush.msra.mxu0 0.0
      %1279 = vmatpush.msra.mxu0 0.0
      %1280 = vmatpush.msra.mxu0 0.0
      %1281 = vmatpush.msra.mxu0 0.0
      %1282 = vmatpush.msra.mxu0 %v959
      %1283 = vmatmul.f32.gmra.mxu0 %v1262
      %v1284 = vpop.f32.mrf.mxu0
      %v1285 = vadd.f32 %v1256, %v1284
      %1286 = vmatmul.f32.gmra.mxu0 %v1265
      %v1287 = vpop.f32.mrf.mxu0
      %v1288 = vadd.f32 %v1259, %v1287
      %1289 = vdwg.mxu0
      %1290 = vrot.lane.b32.xlu0 %v950, 112
      %v1291 = vpop.permute.xlu0 %1290
      %1292 = vrot.lane.b32.xlu0 %v950, 80
      %v1293 = vpop.permute.xlu0 %1292
      %v1294 = vsel %vm966, %v1291, 0
      %v1296 = vsel %vm966, %v1293, 0
      %1298 = vmatpush.xpose.msra.mxu0 0.0
      %1299 = vmatpush.xpose.msra.mxu0 0.0
      %1300 = vmatpush.xpose.msra.mxu0 0.0
      %1301 = vmatpush.xpose.msra.mxu0 0.0
      %1302 = vmatpush.xpose.msra.mxu0 0.0
      %1303 = vmatpush.xpose.msra.mxu0 0.0
      %1304 = vmatpush.xpose.msra.mxu0 0.0
      %1305 = vmatpush.xpose.msra.mxu0 0.0
      %1306 = vmatpush.xpose.msra.mxu0 0.0
      %1307 = vmatpush.xpose.msra.mxu0 0.0
      %1308 = vmatpush.xpose.msra.mxu0 0.0
      %1309 = vmatpush.xpose.msra.mxu0 0.0
      %1310 = vmatpush.xpose.msra.mxu0 0.0
      %1311 = vmatpush.xpose.msra.mxu0 0.0
      %1312 = vmatpush.xpose.msra.mxu0 0.0
      %1313 = vmatpush.xpose.msra.mxu0 %v1296
      %1314 = vmatmul.f32.gmra.mxu0 %v1294
      %v1315 = vpop.f32.mrf.mxu0
      %v1316 = vadd.f32 0.0, %v1315
      %1317 = vdwg.mxu0
      %1318 = vrot.lane.b32.xlu0 %v953, 112
      %v1319 = vpop.permute.xlu0 %1318
      %1320 = vrot.lane.b32.xlu0 %v953, 80
      %v1321 = vpop.permute.xlu0 %1320
      %v1322 = vsel %vm966, %v1319, 0
      %v1324 = vsel %vm966, %v1321, 0
      %1326 = vmatpush.xpose.msra.mxu0 0.0
      %1327 = vmatpush.xpose.msra.mxu0 0.0
      %1328 = vmatpush.xpose.msra.mxu0 0.0
      %1329 = vmatpush.xpose.msra.mxu0 0.0
      %1330 = vmatpush.xpose.msra.mxu0 0.0
      %1331 = vmatpush.xpose.msra.mxu0 0.0
      %1332 = vmatpush.xpose.msra.mxu0 0.0
      %1333 = vmatpush.xpose.msra.mxu0 0.0
      %1334 = vmatpush.xpose.msra.mxu0 0.0
      %1335 = vmatpush.xpose.msra.mxu0 0.0
      %1336 = vmatpush.xpose.msra.mxu0 0.0
      %1337 = vmatpush.xpose.msra.mxu0 0.0
      %1338 = vmatpush.xpose.msra.mxu0 0.0
      %1339 = vmatpush.xpose.msra.mxu0 0.0
      %1340 = vmatpush.xpose.msra.mxu0 0.0
      %1341 = vmatpush.xpose.msra.mxu0 %v1324
      %1342 = vmatmul.f32.gmra.mxu0 %v1322
      %v1343 = vpop.f32.mrf.mxu0
      %v1344 = vadd.f32 0.0, %v1343
      %1345 = vdwg.mxu0
      %v1346 = vsel %vm1022, -1e+30, %v1316
      %v1347 = vsel %vm1023, -1e+30, %v1344
      %v1348 = vsel %vm966, %v1346, -inf
      %1349 = vmax.xlane.f32.xlu0 %v1348
      %v1350 = vpop.xlane.xlu0 %1349
      %v1351 = vsel %vm966, %v1347, -inf
      %1352 = vmax.xlane.f32.xlu0 %v1351
      %v1353 = vpop.xlane.xlu0 %1352
      %v1354 = vsub.f32 %v1346, %v1350
      %v1355 = vsub.f32 %v1347, %v1353
      %v1356 = vmul.f32 %v1354, 1.442695
      %v1357 = vpow.pop %v1356
      %v1358 = vmul.f32 %v1355, 1.442695
      %v1359 = vpow.pop %v1358
      %v1360 = vsel %vm966, %v1357, 0.0
      %1361 = vadd.xlane.f32.xlu0 %v1360
      %v1362 = vpop.xlane.xlu0 %1361
      %v1363 = vsel %vm966, %v1359, 0.0
      %1364 = vadd.xlane.f32.xlu0 %v1363
      %v1365 = vpop.xlane.xlu0 %1364
      %v1366 = vrcp.pop %v1362
      %v1367 = vrcp.pop %v1365
      %v1368 = vmul.f32 %v1357, %v1366
      %v1369 = vmul.f32 %v1359, %v1367
      %1370 = vrot.lane.b32.xlu0 %v950, 48
      %v1371 = vpop.permute.xlu0 %1370
      %v1374 = vsel %vm966, %v1368, 0
      %1376 = vmatpush.msra.mxu0 0.0
      %1377 = vmatpush.msra.mxu0 0.0
      %1378 = vmatpush.msra.mxu0 0.0
      %1379 = vmatpush.msra.mxu0 0.0
      %1380 = vmatpush.msra.mxu0 0.0
      %1381 = vmatpush.msra.mxu0 0.0
      %1382 = vmatpush.msra.mxu0 0.0
      %1383 = vmatpush.msra.mxu0 0.0
      %1384 = vmatpush.msra.mxu0 0.0
      %1385 = vmatpush.msra.mxu0 0.0
      %1386 = vmatpush.msra.mxu0 0.0
      %1387 = vmatpush.msra.mxu0 0.0
      %1388 = vmatpush.msra.mxu0 0.0
      %1389 = vmatpush.msra.mxu0 0.0
      %1390 = vmatpush.msra.mxu0 0.0
      %1391 = vmatpush.msra.mxu0 %v1371
      %1392 = vmatmul.f32.gmra.mxu0 %v1374
      %v1393 = vpop.f32.mrf.mxu0
      %v1394 = vadd.f32 0.0, %v1393
      %1395 = vdwg.mxu0
      %1396 = vrot.lane.b32.xlu0 %v953, 48
      %v1397 = vpop.permute.xlu0 %1396
      %v1400 = vsel %vm966, %v1369, 0
      %1402 = vmatpush.msra.mxu0 0.0
      %1403 = vmatpush.msra.mxu0 0.0
      %1404 = vmatpush.msra.mxu0 0.0
      %1405 = vmatpush.msra.mxu0 0.0
      %1406 = vmatpush.msra.mxu0 0.0
      %1407 = vmatpush.msra.mxu0 0.0
      %1408 = vmatpush.msra.mxu0 0.0
      %1409 = vmatpush.msra.mxu0 0.0
      %1410 = vmatpush.msra.mxu0 0.0
      %1411 = vmatpush.msra.mxu0 0.0
      %1412 = vmatpush.msra.mxu0 0.0
      %1413 = vmatpush.msra.mxu0 0.0
      %1414 = vmatpush.msra.mxu0 0.0
      %1415 = vmatpush.msra.mxu0 0.0
      %1416 = vmatpush.msra.mxu0 0.0
      %1417 = vmatpush.msra.mxu0 %v1397
      %1418 = vmatmul.f32.gmra.mxu0 %v1400
      %v1419 = vpop.f32.mrf.mxu0
      %v1420 = vadd.f32 0.0, %v1419
      %1421 = vdwg.mxu0
      %v1423 = vsel %vm966, %v1394, 0
      %v1426 = vsel %vm966, %v1420, 0
      %1428 = vmatpush.msra.mxu0 0.0
      %1429 = vmatpush.msra.mxu0 0.0
      %1430 = vmatpush.msra.mxu0 0.0
      %1431 = vmatpush.msra.mxu0 0.0
      %1432 = vmatpush.msra.mxu0 0.0
      %1433 = vmatpush.msra.mxu0 0.0
      %1434 = vmatpush.msra.mxu0 0.0
      %1435 = vmatpush.msra.mxu0 0.0
      %1436 = vmatpush.msra.mxu0 0.0
      %1437 = vmatpush.msra.mxu0 0.0
      %1438 = vmatpush.msra.mxu0 0.0
      %1439 = vmatpush.msra.mxu0 0.0
      %1440 = vmatpush.msra.mxu0 0.0
      %1441 = vmatpush.msra.mxu0 0.0
      %1442 = vmatpush.msra.mxu0 0.0
      %1443 = vmatpush.msra.mxu0 %v961
      %1444 = vmatmul.f32.gmra.mxu0 %v1423
      %v1445 = vpop.f32.mrf.mxu0
      %v1446 = vadd.f32 0.0, %v1445
      %1447 = vmatmul.f32.gmra.mxu0 %v1426
      %v1448 = vpop.f32.mrf.mxu0
      %v1449 = vadd.f32 0.0, %v1448
      %1450 = vdwg.mxu0
      %v1451 = vadd.f32 %v1285, %v1446
      %v1452 = vadd.f32 %v1288, %v1449
      %1453 = vrot.lane.b32.xlu0 %v950, 104
      %v1454 = vpop.permute.xlu0 %1453
      %1455 = vrot.lane.b32.xlu0 %v950, 72
      %v1456 = vpop.permute.xlu0 %1455
      %v1457 = vsel %vm966, %v1454, 0
      %v1459 = vsel %vm966, %v1456, 0
      %1461 = vmatpush.xpose.msra.mxu0 0.0
      %1462 = vmatpush.xpose.msra.mxu0 0.0
      %1463 = vmatpush.xpose.msra.mxu0 0.0
      %1464 = vmatpush.xpose.msra.mxu0 0.0
      %1465 = vmatpush.xpose.msra.mxu0 0.0
      %1466 = vmatpush.xpose.msra.mxu0 0.0
      %1467 = vmatpush.xpose.msra.mxu0 0.0
      %1468 = vmatpush.xpose.msra.mxu0 0.0
      %1469 = vmatpush.xpose.msra.mxu0 0.0
      %1470 = vmatpush.xpose.msra.mxu0 0.0
      %1471 = vmatpush.xpose.msra.mxu0 0.0
      %1472 = vmatpush.xpose.msra.mxu0 0.0
      %1473 = vmatpush.xpose.msra.mxu0 0.0
      %1474 = vmatpush.xpose.msra.mxu0 0.0
      %1475 = vmatpush.xpose.msra.mxu0 0.0
      %1476 = vmatpush.xpose.msra.mxu0 %v1459
      %1477 = vmatmul.f32.gmra.mxu0 %v1457
      %v1478 = vpop.f32.mrf.mxu0
      %v1479 = vadd.f32 0.0, %v1478
      %1480 = vdwg.mxu0
      %1481 = vrot.lane.b32.xlu0 %v953, 104
      %v1482 = vpop.permute.xlu0 %1481
      %1483 = vrot.lane.b32.xlu0 %v953, 72
      %v1484 = vpop.permute.xlu0 %1483
      %v1485 = vsel %vm966, %v1482, 0
      %v1487 = vsel %vm966, %v1484, 0
      %1489 = vmatpush.xpose.msra.mxu0 0.0
      %1490 = vmatpush.xpose.msra.mxu0 0.0
      %1491 = vmatpush.xpose.msra.mxu0 0.0
      %1492 = vmatpush.xpose.msra.mxu0 0.0
      %1493 = vmatpush.xpose.msra.mxu0 0.0
      %1494 = vmatpush.xpose.msra.mxu0 0.0
      %1495 = vmatpush.xpose.msra.mxu0 0.0
      %1496 = vmatpush.xpose.msra.mxu0 0.0
      %1497 = vmatpush.xpose.msra.mxu0 0.0
      %1498 = vmatpush.xpose.msra.mxu0 0.0
      %1499 = vmatpush.xpose.msra.mxu0 0.0
      %1500 = vmatpush.xpose.msra.mxu0 0.0
      %1501 = vmatpush.xpose.msra.mxu0 0.0
      %1502 = vmatpush.xpose.msra.mxu0 0.0
      %1503 = vmatpush.xpose.msra.mxu0 0.0
      %1504 = vmatpush.xpose.msra.mxu0 %v1487
      %1505 = vmatmul.f32.gmra.mxu0 %v1485
      %v1506 = vpop.f32.mrf.mxu0
      %v1507 = vadd.f32 0.0, %v1506
      %1508 = vdwg.mxu0
      %v1509 = vsel %vm1022, -1e+30, %v1479
      %v1510 = vsel %vm1023, -1e+30, %v1507
      %v1511 = vsel %vm966, %v1509, -inf
      %1512 = vmax.xlane.f32.xlu0 %v1511
      %v1513 = vpop.xlane.xlu0 %1512
      %v1514 = vsel %vm966, %v1510, -inf
      %1515 = vmax.xlane.f32.xlu0 %v1514
      %v1516 = vpop.xlane.xlu0 %1515
      %v1517 = vsub.f32 %v1509, %v1513
      %v1518 = vsub.f32 %v1510, %v1516
      %v1519 = vmul.f32 %v1517, 1.442695
      %v1520 = vpow.pop %v1519
      %v1521 = vmul.f32 %v1518, 1.442695
      %v1522 = vpow.pop %v1521
      %v1523 = vsel %vm966, %v1520, 0.0
      %1524 = vadd.xlane.f32.xlu0 %v1523
      %v1525 = vpop.xlane.xlu0 %1524
      %v1526 = vsel %vm966, %v1522, 0.0
      %1527 = vadd.xlane.f32.xlu0 %v1526
      %v1528 = vpop.xlane.xlu0 %1527
      %v1529 = vrcp.pop %v1525
      %v1530 = vrcp.pop %v1528
      %v1531 = vmul.f32 %v1520, %v1529
      %v1532 = vmul.f32 %v1522, %v1530
      %1533 = vrot.lane.b32.xlu0 %v950, 40
      %v1534 = vpop.permute.xlu0 %1533
      %v1537 = vsel %vm966, %v1531, 0
      %1539 = vmatpush.msra.mxu0 0.0
      %1540 = vmatpush.msra.mxu0 0.0
      %1541 = vmatpush.msra.mxu0 0.0
      %1542 = vmatpush.msra.mxu0 0.0
      %1543 = vmatpush.msra.mxu0 0.0
      %1544 = vmatpush.msra.mxu0 0.0
      %1545 = vmatpush.msra.mxu0 0.0
      %1546 = vmatpush.msra.mxu0 0.0
      %1547 = vmatpush.msra.mxu0 0.0
      %1548 = vmatpush.msra.mxu0 0.0
      %1549 = vmatpush.msra.mxu0 0.0
      %1550 = vmatpush.msra.mxu0 0.0
      %1551 = vmatpush.msra.mxu0 0.0
      %1552 = vmatpush.msra.mxu0 0.0
      %1553 = vmatpush.msra.mxu0 0.0
      %1554 = vmatpush.msra.mxu0 %v1534
      %1555 = vmatmul.f32.gmra.mxu0 %v1537
      %v1556 = vpop.f32.mrf.mxu0
      %v1557 = vadd.f32 0.0, %v1556
      %1558 = vdwg.mxu0
      %1559 = vrot.lane.b32.xlu0 %v953, 40
      %v1560 = vpop.permute.xlu0 %1559
      %v1563 = vsel %vm966, %v1532, 0
      %1565 = vmatpush.msra.mxu0 0.0
      %1566 = vmatpush.msra.mxu0 0.0
      %1567 = vmatpush.msra.mxu0 0.0
      %1568 = vmatpush.msra.mxu0 0.0
      %1569 = vmatpush.msra.mxu0 0.0
      %1570 = vmatpush.msra.mxu0 0.0
      %1571 = vmatpush.msra.mxu0 0.0
      %1572 = vmatpush.msra.mxu0 0.0
      %1573 = vmatpush.msra.mxu0 0.0
      %1574 = vmatpush.msra.mxu0 0.0
      %1575 = vmatpush.msra.mxu0 0.0
      %1576 = vmatpush.msra.mxu0 0.0
      %1577 = vmatpush.msra.mxu0 0.0
      %1578 = vmatpush.msra.mxu0 0.0
      %1579 = vmatpush.msra.mxu0 0.0
      %1580 = vmatpush.msra.mxu0 %v1560
      %1581 = vmatmul.f32.gmra.mxu0 %v1563
      %v1582 = vpop.f32.mrf.mxu0
      %v1583 = vadd.f32 0.0, %v1582
      %1584 = vdwg.mxu0
      %v1586 = vsel %vm966, %v1557, 0
      %v1589 = vsel %vm966, %v1583, 0
      %1591 = vmatpush.msra.mxu0 0.0
      %1592 = vmatpush.msra.mxu0 0.0
      %1593 = vmatpush.msra.mxu0 0.0
      %1594 = vmatpush.msra.mxu0 0.0
      %1595 = vmatpush.msra.mxu0 0.0
      %1596 = vmatpush.msra.mxu0 0.0
      %1597 = vmatpush.msra.mxu0 0.0
      %1598 = vmatpush.msra.mxu0 0.0
      %1599 = vmatpush.msra.mxu0 0.0
      %1600 = vmatpush.msra.mxu0 0.0
      %1601 = vmatpush.msra.mxu0 0.0
      %1602 = vmatpush.msra.mxu0 0.0
      %1603 = vmatpush.msra.mxu0 0.0
      %1604 = vmatpush.msra.mxu0 0.0
      %1605 = vmatpush.msra.mxu0 0.0
      %1606 = vmatpush.msra.mxu0 %v962
      %1607 = vmatmul.f32.gmra.mxu0 %v1586
      %v1608 = vpop.f32.mrf.mxu0
      %v1609 = vadd.f32 0.0, %v1608
      %1610 = vmatmul.f32.gmra.mxu0 %v1589
      %v1611 = vpop.f32.mrf.mxu0
      %v1612 = vadd.f32 0.0, %v1611
      %1613 = vdwg.mxu0
      %v1614 = vadd.f32 %v1451, %v1609
      %v1615 = vadd.f32 %v1452, %v1612
      %v1616 = vadd.f32 %v852, %v1614
      %v1617 = vadd.f32 %v853, %v1615
      %v1618 = vld [vmem:[%s826] sm:$0x1]
      %v1620 = vperm.slane %v1618, 0
      %v1622 = vadd.f32 %v1616, %v1620
      %v1623 = vadd.f32 %v1617, %v1620
      %v1624 = vld [vmem:[%s807] sm:$0x1]
      %v1625 = vld [vmem:[%s810] sm:$0x1]
      %v1626 = vsel %vm856, %v1622, 0.0
      %1627 = vadd.xlane.f32.xlu0 %v1626
      %v1628 = vpop.xlane.xlu0 %1627
      %v1629 = vsel %vm856, %v1623, 0.0
      %1630 = vadd.xlane.f32.xlu0 %v1629
      %v1631 = vpop.xlane.xlu0 %1630
      %v1632 = vmul.f32 %v1628, %v869
      %v1633 = vmul.f32 %v1631, %v869
      %v1634 = vsub.f32 %v1622, %v1632
      %v1635 = vsub.f32 %v1623, %v1633
      %v1636 = vmul.f32 %v1634, %v1634
      %v1637 = vmul.f32 %v1635, %v1635
      %v1638 = vsel %vm856, %v1636, 0.0
      %1639 = vadd.xlane.f32.xlu0 %v1638
      %v1640 = vpop.xlane.xlu0 %1639
      %v1641 = vsel %vm856, %v1637, 0.0
      %1642 = vadd.xlane.f32.xlu0 %v1641
      %v1643 = vpop.xlane.xlu0 %1642
      %v1644 = vmul.f32 %v1640, %v869
      %v1645 = vmul.f32 %v1643, %v869
      %v1646 = vadd.f32 %v1644, 1e-05
      %v1647 = vadd.f32 %v1645, 1e-05
      %v1648 = vrsqrt.pop %v1646
      %v1649 = vmul.f32 %v1648, %v1646
      %v1650 = vmul.f32 %v1649, %v1648
      %v1651 = vmul.f32 0.5, %v1650
      %v1652 = vsub.f32 1.5, %v1651
      %v1653 = vmul.f32 %v1648, %v1652
      %vm1654 = vweird.f32 %v1646
      %vm1655 = vweird.f32 %v1648
      %vm1656 = vmor %vm1654, %vm1655
      %v1657 = vsel %vm1656, %v1648, %v1653
      %v1658 = vrsqrt.pop %v1647
      %v1659 = vmul.f32 %v1658, %v1647
      %v1660 = vmul.f32 %v1659, %v1658
      %v1661 = vmul.f32 0.5, %v1660
      %v1662 = vsub.f32 1.5, %v1661
      %v1663 = vmul.f32 %v1658, %v1662
      %vm1664 = vweird.f32 %v1647
      %vm1665 = vweird.f32 %v1658
      %vm1666 = vmor %vm1664, %vm1665
      %v1667 = vsel %vm1666, %v1658, %v1663
      %v1668 = vmul.f32 %v1634, %v1657
      %v1669 = vmul.f32 %v1635, %v1667
      %v1671 = vperm.slane %v1624, 0
      %v1673 = vmul.f32 %v1668, %v1671
      %v1674 = vmul.f32 %v1669, %v1671
      %v1676 = vperm.slane %v1625, 0
      %v1678 = vadd.f32 %v1673, %v1676
      %v1679 = vadd.f32 %v1674, %v1676
      %v1680 = vld [vmem:[%s831] sm:$0xff]
      %v1681 = vld [vmem:[%s831 + $0x8] sm:$0xff]
      %v1682 = vld [vmem:[%s831 + $0x10] sm:$0xff]
      %v1683 = vld [vmem:[%s831 + $0x18] sm:$0xff]
      %v1684 = vld [vmem:[%s834] sm:$0x1]
      %v1686 = vperm.slane %v1684, 0
      %v1689 = vsel %vm856, %v1678, 0
      %v1692 = vsel %vm856, %v1679, 0
      %1694 = vmatpush.msra.mxu0 0.0
      %1695 = vmatpush.msra.mxu0 0.0
      %1696 = vmatpush.msra.mxu0 0.0
      %1697 = vmatpush.msra.mxu0 0.0
      %1698 = vmatpush.msra.mxu0 0.0
      %1699 = vmatpush.msra.mxu0 0.0
      %1700 = vmatpush.msra.mxu0 0.0
      %1701 = vmatpush.msra.mxu0 0.0
      %1702 = vmatpush.msra.mxu0 0.0
      %1703 = vmatpush.msra.mxu0 0.0
      %1704 = vmatpush.msra.mxu0 0.0
      %1705 = vmatpush.msra.mxu0 0.0
      %1706 = vmatpush.msra.mxu0 %v1683
      %1707 = vmatpush.msra.mxu0 %v1682
      %1708 = vmatpush.msra.mxu0 %v1681
      %1709 = vmatpush.msra.mxu0 %v1680
      %1710 = vmatmul.f32.gmra.mxu0 %v1689
      %v1711 = vpop.f32.mrf.mxu0
      %v1712 = vadd.f32 %v1686, %v1711
      %1713 = vmatmul.f32.gmra.mxu0 %v1692
      %v1714 = vpop.f32.mrf.mxu0
      %v1715 = vadd.f32 %v1686, %v1714
      %1716 = vdwg.mxu0
      %v1717 = vmul.f32 %v1712, 0.5
      %v1718 = vmul.f32 %v1715, 0.5
      %v1719 = vmul.f32 %v1712, 0.70710677
      %v1720 = vmul.f32 %v1715, 0.70710677
      %v1721 = vmul.f32 %v1719, %v1719
      %v1722 = vmin.f32 16.0, %v1721
      %v1723 = vmul.f32 %v1722, 2.1237322e-06
      %v1724 = vadd.f32 %v1723, 0.00028619796
      %v1725 = vmul.f32 %v1722, %v1724
      %v1726 = vadd.f32 %v1725, 0.0036580483
      %v1727 = vmul.f32 %v1722, %v1726
      %v1728 = vadd.f32 %v1727, 0.05243302
      %v1729 = vmul.f32 %v1722, %v1728
      %v1730 = vadd.f32 %v1729, 0.18741608
      %v1731 = vmul.f32 %v1722, %v1730
      %v1732 = vadd.f32 %v1731, 1.1283791
      %v1733 = vmul.f32 %v1719, %v1732
      %v1734 = vmul.f32 %v1722, 3.8918573e-05
      %v1735 = vadd.f32 %v1734, 0.001143296
      %v1736 = vmul.f32 %v1722, %v1735
      %v1737 = vadd.f32 %v1736, 0.014752088
      %v1738 = vmul.f32 %v1722, %v1737
      %v1739 = vadd.f32 %v1738, 0.112945676
      %v1740 = vmul.f32 %v1722, %v1739
      %v1741 = vadd.f32 %v1740, 0.4994258
      %v1742 = vmul.f32 %v1722, %v1741
      %v1743 = vadd.f32 %v1742, 1.0
      %v1744 = vrcp.pop %v1743
      %v1745 = vmul.f32 %v1743, %v1744
      %v1746 = vsub.f32 1.0, %v1745
      %v1747 = vmul.f32 %v1744, %v1746
      %v1748 = vadd.f32 %v1744, %v1747
      %vm1749 = vweird.f32 %v1743
      %vm1750 = vweird.f32 %v1744
      %vm1751 = vmor %vm1749, %vm1750
      %v1752 = vsel %vm1751, %v1744, %v1748
      %v1753 = vand.u32 2147483647, %v1743
      %vm1754 = vcmp.eq.f32.partialorder %v1753, 8.507059e+37
      %v1755 = vand.u32 %v1743, 2147483648
      %v1756 = vor.u32 1.1754944e-38, %v1755
      %v1757 = vsel %vm1754, %v1756, %v1752
      %v1758 = vmul.f32 %v1733, %v1757
      %v1759 = vmin.f32 %v1758, 1.0
      %v1760 = vmax.f32 %v1759, -1.0
      %v1761 = vmul.f32 %v1720, %v1720
      %v1762 = vmin.f32 16.0, %v1761
      %v1763 = vmul.f32 %v1762, 2.1237322e-06
      %v1764 = vadd.f32 %v1763, 0.00028619796
      %v1765 = vmul.f32 %v1762, %v1764
      %v1766 = vadd.f32 %v1765, 0.0036580483
      %v1767 = vmul.f32 %v1762, %v1766
      %v1768 = vadd.f32 %v1767, 0.05243302
      %v1769 = vmul.f32 %v1762, %v1768
      %v1770 = vadd.f32 %v1769, 0.18741608
      %v1771 = vmul.f32 %v1762, %v1770
      %v1772 = vadd.f32 %v1771, 1.1283791
      %v1773 = vmul.f32 %v1720, %v1772
      %v1774 = vmul.f32 %v1762, 3.8918573e-05
      %v1775 = vadd.f32 %v1774, 0.001143296
      %v1776 = vmul.f32 %v1762, %v1775
      %v1777 = vadd.f32 %v1776, 0.014752088
      %v1778 = vmul.f32 %v1762, %v1777
      %v1779 = vadd.f32 %v1778, 0.112945676
      %v1780 = vmul.f32 %v1762, %v1779
      %v1781 = vadd.f32 %v1780, 0.4994258
      %v1782 = vmul.f32 %v1762, %v1781
      %v1783 = vadd.f32 %v1782, 1.0
      %v1784 = vrcp.pop %v1783
      %v1785 = vmul.f32 %v1783, %v1784
      %v1786 = vsub.f32 1.0, %v1785
      %v1787 = vmul.f32 %v1784, %v1786
      %v1788 = vadd.f32 %v1784, %v1787
      %vm1789 = vweird.f32 %v1783
      %vm1790 = vweird.f32 %v1784
      %vm1791 = vmor %vm1789, %vm1790
      %v1792 = vsel %vm1791, %v1784, %v1788
      %v1793 = vand.u32 2147483647, %v1783
      %vm1794 = vcmp.eq.f32.partialorder %v1793, 8.507059e+37
      %v1795 = vand.u32 %v1783, 2147483648
      %v1796 = vor.u32 1.1754944e-38, %v1795
      %v1797 = vsel %vm1794, %v1796, %v1792
      %v1798 = vmul.f32 %v1773, %v1797
      %v1799 = vmin.f32 %v1798, 1.0
      %v1800 = vmax.f32 %v1799, -1.0
      %v1801 = vadd.f32 %v1760, 1.0
      %v1802 = vadd.f32 %v1800, 1.0
      %v1803 = vmul.f32 %v1717, %v1801
      %v1804 = vmul.f32 %v1718, %v1802
      %v1805 = vld [vmem:[%s839] sm:$0xff]
      %v1806 = vld [vmem:[%s839 + $0x8] sm:$0xff]
      %v1807 = vld [vmem:[%s839 + $0x10] sm:$0xff]
      %v1808 = vld [vmem:[%s839 + $0x18] sm:$0xff]
      %v1809 = vld [vmem:[%s839 + $0x20] sm:$0xff]
      %v1810 = vld [vmem:[%s839 + $0x28] sm:$0xff]
      %v1811 = vld [vmem:[%s839 + $0x30] sm:$0xff]
      %v1812 = vld [vmem:[%s839 + $0x38] sm:$0xff]
      %v1813 = vld [vmem:[%s839 + $0x40] sm:$0xff]
      %v1814 = vld [vmem:[%s839 + $0x48] sm:$0xff]
      %v1815 = vld [vmem:[%s839 + $0x50] sm:$0xff]
      %v1816 = vld [vmem:[%s839 + $0x58] sm:$0xff]
      %v1817 = vld [vmem:[%s839 + $0x60] sm:$0xff]
      %v1818 = vld [vmem:[%s839 + $0x68] sm:$0xff]
      %v1819 = vld [vmem:[%s839 + $0x70] sm:$0xff]
      %v1820 = vld [vmem:[%s839 + $0x78] sm:$0xff]
      %v1821 = vld [vmem:[%s842] sm:$0x1]
      %v1823 = vperm.slane %v1821, 0
      %1825 = vmatpush.msra.mxu0 %v1820
      %1826 = vmatpush.msra.mxu0 %v1819
      %1827 = vmatpush.msra.mxu0 %v1818
      %1828 = vmatpush.msra.mxu0 %v1817
      %1829 = vmatpush.msra.mxu0 %v1816
      %1830 = vmatpush.msra.mxu0 %v1815
      %1831 = vmatpush.msra.mxu0 %v1814
      %1832 = vmatpush.msra.mxu0 %v1813
      %1833 = vmatpush.msra.mxu0 %v1812
      %1834 = vmatpush.msra.mxu0 %v1811
      %1835 = vmatpush.msra.mxu0 %v1810
      %1836 = vmatpush.msra.mxu0 %v1809
      %1837 = vmatpush.msra.mxu0 %v1808
      %1838 = vmatpush.msra.mxu0 %v1807
      %1839 = vmatpush.msra.mxu0 %v1806
      %1840 = vmatpush.msra.mxu0 %v1805
      %1841 = vmatmul.f32.gmra.mxu0 %v1803
      %v1842 = vpop.f32.mrf.mxu0
      %v1843 = vadd.f32 %v1823, %v1842
      %1844 = vmatmul.f32.gmra.mxu0 %v1804
      %v1845 = vpop.f32.mrf.mxu0
      %v1846 = vadd.f32 %v1823, %v1845
      %1847 = vdwg.mxu0
      %v1848 = vadd.f32 %v1622, %v1843
      %v1849 = vadd.f32 %v1623, %v1846
      %1850 = vst.msk [vmem:[#allocation2] sm:$0xff] %vm856, %v1848
      %1851 = vst.msk [vmem:[#allocation2 + $0x8] sm:$0xff] %vm856, %v1849
      %p1852 = scmp.eq.s32.totalorder %s38, 1
      // Predicated region
      $region109: #{bert_ite_forward.1} parent=103 // pred_check
        %p1853 = pneg %p1852
      $region110: #{bert_ite_forward.1} parent=103 // pred_check_branch
        %1855 = sbr.rel (%p1853) target = $region112
      $region111: #{bert_ite_forward.1} parent=103 // pred_region
        %v1856 = vld [vmem:[%s14] sm:$0x3]
        %v1858 = vrot.slane %v1856, 1
        %v1861 = vmul.f32 %v1848, %v1856
        %v1862 = vmul.f32 %v1849, %v1858
        %v1863 = vld [vmem:[%s15] sm:$0x1]
        %v1865 = vperm.slane %v1863, 0
        %v1867 = vmul.f32 %v1861, %v1865
        %v1868 = vmul.f32 %v1862, %v1865
        %v1871 = vrot.slane %v1868, 7
        %vm1872 = vcmask 1041409
        %v1873 = vsel %vm1872, %v1871, %v1867
        %vm1875 = vcmask 254976
        %v1876 = vsel %vm1875, %v1873, 0.0
        %1877 = vadd.xlane.f32.xlu0 %v1876
        %v1878 = vpop.xlane.xlu0 %1877
        %v1879 = vld [vmem:[#allocation3] sm:$0x1]
        %v1881 = vperm.slane %v1879, 0
        %v1883 = vadd.f32 %v1878, %v1881
        %v1884 = vxor.u32 %v1883, 2147483648
        %v1885 = vmul.f32 %v1884, 1.442695
        %v1886 = vpow.pop %v1885
        %v1887 = vadd.f32 %v1886, 1.0
        %v1888 = vrcp.pop %v1887
        %v1889 = vmul.f32 %v1887, %v1888
        %v1890 = vsub.f32 1.0, %v1889
        %v1891 = vmul.f32 %v1888, %v1890
        %v1892 = vadd.f32 %v1888, %v1891
        %vm1893 = vweird.f32 %v1887
        %vm1894 = vweird.f32 %v1888
        %vm1895 = vmor %vm1893, %vm1894
        %v1896 = vsel %vm1895, %v1888, %v1892
        %v1897 = vand.u32 2147483647, %v1887
        %vm1898 = vcmp.eq.f32.partialorder %v1897, 8.507059e+37
        %v1899 = vand.u32 %v1887, 2147483648
        %v1900 = vor.u32 1.1754944e-38, %v1899
        %v1901 = vsel %vm1898, %v1900, %v1896
        %v1902 = vmul.f32 1.0, %v1901
        %vm1903 = vcmask 1024
        %1904 = vst.msk [vmem:[%s21] sm:$0x3] %vm1903, %v1902
        %v1905 = vld [vmem:[%s17] sm:$0xff]
        %v1906 = vld [vmem:[%s17 + $0x8] sm:$0xff]
        %v1907 = vld [vmem:[%s17 + $0x10] sm:$0xff]
        %v1908 = vld [vmem:[%s17 + $0x18] sm:$0xff]
        %v1909 = vld [vmem:[%s18] sm:$0x1]
        %v1911 = vperm.slane %v1909, 0
        %v1915 = vrot.slane %v1862, 7
        %v1916 = vsel %vm1872, %v1915, %v1861
        %v1917 = vsel %vm856, %v1916, 0
        %1919 = vmatpush.msra.mxu0 0.0
        %1920 = vmatpush.msra.mxu0 0.0
        %1921 = vmatpush.msra.mxu0 0.0
        %1922 = vmatpush.msra.mxu0 0.0
        %1923 = vmatpush.msra.mxu0 0.0
        %1924 = vmatpush.msra.mxu0 0.0
        %1925 = vmatpush.msra.mxu0 0.0
        %1926 = vmatpush.msra.mxu0 0.0
        %1927 = vmatpush.msra.mxu0 0.0
        %1928 = vmatpush.msra.mxu0 0.0
        %1929 = vmatpush.msra.mxu0 0.0
        %1930 = vmatpush.msra.mxu0 0.0
        %1931 = vmatpush.msra.mxu0 %v1908
        %1932 = vmatpush.msra.mxu0 %v1907
        %1933 = vmatpush.msra.mxu0 %v1906
        %1934 = vmatpush.msra.mxu0 %v1905
        %1935 = vmatmul.f32.gmra.mxu0 %v1917
        %v1936 = vpop.f32.mrf.mxu0
        %v1937 = vadd.f32 %v1911, %v1936
        %1938 = vdwg.mxu0
        %v1939 = vxor.u32 %v1937, 2147483648
        %v1940 = vmul.f32 %v1939, 1.442695
        %v1941 = vpow.pop %v1940
        %v1942 = vadd.f32 %v1941, 1.0
        %v1943 = vrcp.pop %v1942
        %v1944 = vmul.f32 %v1942, %v1943
        %v1945 = vsub.f32 1.0, %v1944
        %v1946 = vmul.f32 %v1943, %v1945
        %v1947 = vadd.f32 %v1943, %v1946
        %vm1948 = vweird.f32 %v1942
        %vm1949 = vweird.f32 %v1943
        %vm1950 = vmor %vm1948, %vm1949
        %v1951 = vsel %vm1950, %v1943, %v1947
        %v1952 = vand.u32 2147483647, %v1942
        %vm1953 = vcmp.eq.f32.partialorder %v1952, 8.507059e+37
        %v1954 = vand.u32 %v1942, 2147483648
        %v1955 = vor.u32 1.1754944e-38, %v1954
        %v1956 = vsel %vm1953, %v1955, %v1951
        %v1957 = vmul.f32 1.0, %v1956
        %v1958 = vld [vmem:[%s19] sm:$0x1]
        %v1960 = vperm.slane %v1958, 0
        %v1962 = vmul.f32 %v1957, %v1960
        %vm1963 = vcmask 517120
        %v1964 = vsel %vm1963, %v1962, 0.0
        %1965 = vadd.xlane.f32.xlu0 %v1964
        %v1966 = vpop.xlane.xlu0 %1965
        %v1967 = vld [vmem:[#allocation4] sm:$0x1]
        %v1969 = vperm.slane %v1967, 0
        %v1971 = vadd.f32 %v1966, %v1969
        %v1972 = vxor.u32 %v1971, 2147483648
        %v1973 = vmul.f32 %v1972, 1.442695
        %v1974 = vpow.pop %v1973
        %v1975 = vadd.f32 %v1974, 1.0
        %v1976 = vrcp.pop %v1975
        %v1977 = vmul.f32 %v1975, %v1976
        %v1978 = vsub.f32 1.0, %v1977
        %v1979 = vmul.f32 %v1976, %v1978
        %v1980 = vadd.f32 %v1976, %v1979
        %vm1981 = vweird.f32 %v1975
        %vm1982 = vweird.f32 %v1976
        %vm1983 = vmor %vm1981, %vm1982
        %v1984 = vsel %vm1983, %v1976, %v1980
        %v1985 = vand.u32 2147483647, %v1975
        %vm1986 = vcmp.eq.f32.partialorder %v1985, 8.507059e+37
        %v1987 = vand.u32 %v1975, 2147483648
        %v1988 = vor.u32 1.1754944e-38, %v1987
        %v1989 = vsel %vm1986, %v1988, %v1984
        %v1990 = vmul.f32 1.0, %v1989
        %1991 = vst.msk [vmem:[%s22] sm:$0x3] %vm1903, %v1990
      $region112: #{bert_ite_forward.1} parent=103 // pred_fallthru
        _
      // Predicated region
      $region113: #{bert_ite_forward.1} parent=103 // pred_check
        %p1992 = pneg %p552
      $region114: #{bert_ite_forward.1} parent=103 // pred_check_branch
        %1994 = sbr.rel (%p1992) target = $region116
      $region115: #{bert_ite_forward.1} parent=103 // pred_region
        _
      $region116: #{bert_ite_forward.1} parent=103 // pred_fallthru
        _
      // Predicated region
      $region117: #{bert_ite_forward.1} parent=103 // pred_check
        %p1995 = pneg %p573
      $region118: #{bert_ite_forward.1} parent=103 // pred_check_branch
        %1997 = sbr.rel (%p1995) target = $region120
      $region119: #{bert_ite_forward.1} parent=103 // pred_region
        _
      $region120: #{bert_ite_forward.1} parent=103 // pred_fallthru
        _
      // Predicated region
      $region121: #{bert_ite_forward.1} parent=103 // pred_check
        %p1998 = pneg %p552
      $region122: #{bert_ite_forward.1} parent=103 // pred_check_branch
        %2000 = sbr.rel (%p1998) target = $region124
      $region123: #{bert_ite_forward.1} parent=103 // pred_region
        _
      $region124: #{bert_ite_forward.1} parent=103 // pred_fallthru
        _
      // Predicated region
      $region125: #{bert_ite_forward.1} parent=103 // pred_check
        %p2001 = pneg %p573
      $region126: #{bert_ite_forward.1} parent=103 // pred_check_branch
        %2003 = sbr.rel (%p2001) target = $region128
      $region127: #{bert_ite_forward.1} parent=103 // pred_region
        _
      $region128: #{bert_ite_forward.1} parent=103 // pred_fallthru
        _
    $region104: #{bert_ite_forward.1} parent=5 // pred_fallthru
      _
    %p2004 = scmp.le.s32.totalorder 2, %s33
    // Predicated region
    $region129: #{bert_ite_forward.1} parent=5 // pred_check
      %p2005 = pneg %p2004
    $region130: #{bert_ite_forward.1} parent=5 // pred_check_branch
      %2007 = sbr.rel (%p2005) target = $region132
    $region131: #{bert_ite_forward.1} parent=5 // pred_region
      %s2008 = ssub.s32 %s33, 2
    $region132: #{bert_ite_forward.1} parent=5 // pred_fallthru
      _
  $region6: #{bert_ite_forward.1} parent=0 // loop_footer
    %s37 = sadd.s32 1, %s33
  $region7: #{bert_ite_forward.1} parent=0 // loop_footer_branch
    %32 = sbr.rel target = $region3
  $region8: #{bert_ite_forward.1} parent=0 // loop_exit
    _

</llo_original>
